<compile_context>
chip_gen: v7x
topology: tpu7x:2x2x1
jax: 0.10.0
libtpu: 0.0.40
codegen_flags: <defaults>
</compile_context>

<pallas_src>
import math

import jax
import jax.numpy as jnp
from jax import lax
from jax.experimental import pallas as pl
from jax.experimental.pallas import tpu as pltpu

_MASK_NEG = -1e30  # finite "minus infinity" mask bias


def rel_mha_kernel(q_ref, k_ref, v_ref, pos_ref, mask_ref,
                   wq_ref, bq_ref, wk_ref, bk_ref, wv_ref, bv_ref, wp_ref,
                   pbu_ref, pbv_ref, wo_ref, bo_ref,
                   out_ref, acc_ref):
    h = pl.program_id(2)

    @pl.when(h == 0)
    def _init():
        acc_ref[...] = jnp.zeros_like(acc_ref)

    dt = q_ref.dtype                      # MXU input dtype (bf16 inputs stay bf16)
    d_k = wq_ref.shape[-1]
    scale = 1.0 / math.sqrt(d_k)

    # Per-head projections: contraction over the full feature dim F (MXU-friendly), f32 accumulation.
    qh = jnp.dot(q_ref[...], wq_ref[...], preferred_element_type=jnp.float32) + bq_ref[...]   # (tq, dk)
    kh = jnp.dot(k_ref[...], wk_ref[...], preferred_element_type=jnp.float32) + bk_ref[...]   # (T2, dk)
    vh = jnp.dot(v_ref[...], wv_ref[...], preferred_element_type=jnp.float32) + bv_ref[...]   # (T2, dk)
    ph = jnp.dot(pos_ref[...], wp_ref[...], preferred_element_type=jnp.float32)               # (T2, dk)

    # Fold 1/sqrt(d_k) into the query-side operands once (T*dk mults instead of H*T1*T2).
    q_u = ((qh + pbu_ref[...]) * scale).astype(dt)     # (tq, dk)
    q_v = ((qh + pbv_ref[...]) * scale).astype(dt)     # (tq, dk)
    kh_c = kh.astype(dt)
    ph_c = ph.astype(dt)

    # scores = q_u @ k^T + q_v @ p^T : contract the trailing d_k dims, no materialized transpose.
    dn = (((1,), (1,)), ((), ()))
    matrix_ac = lax.dot_general(q_u, kh_c, dn, preferred_element_type=jnp.float32)   # (tq, T2)
    matrix_bd = lax.dot_general(q_v, ph_c, dn, preferred_element_type=jnp.float32)   # (tq, T2)
    scores = matrix_ac + matrix_bd

    # Additive mask bias + multiplicative zero-out (torch masked_fill semantics, NaN-free).
    masked = mask_ref[...] == 0                         # (1, T2) or (tq, T2)
    scores = scores + jnp.where(masked, _MASK_NEG, 0.0).astype(jnp.float32)

    m = jnp.max(scores, axis=-1, keepdims=True)
    p = jnp.exp(scores - m)
    denom = jnp.sum(p, axis=-1, keepdims=True)
    attn = p * pl.reciprocal(denom, approx=False)       # EUP reciprocal instead of a VPU divide
    attn = attn * (1.0 - masked.astype(jnp.float32))    # zero masked columns

    ctx = jnp.dot(attn.astype(dt), vh.astype(dt), preferred_element_type=jnp.float32)  # (tq, dk)

    # Output projection, accumulated over heads:  out = sum_h ctx_h @ Wo[h*dk:(h+1)*dk, :] + bo
    acc_ref[...] += jnp.dot(ctx.astype(dt), wo_ref[...], preferred_element_type=jnp.float32)

    @pl.when(h == pl.num_programs(2) - 1)
    def _finalize():
        out_ref[...] = (acc_ref[...] + bo_ref[...]).astype(out_ref.dtype)


def rel_position_mha(query, key, value, mask, pos_emb, params, n_head, *, tq=None):
    """Forward pass of RelPositionMultiHeadedAttention (eval mode)."""
    B, T1, F = query.shape
    T2 = key.shape[1]
    assert F % n_head == 0
    d_k = F // n_head
    (wq, bq, wk, bk, wv, bv, wp, wo, bo, pos_bias_u, pos_bias_v) = params

    if tq is None:
        tq = min(T1, 128)               # production: 128-256 query rows per tile
    assert T1 % tq == 0, "T1 must be divisible by the query tile size"
    n_qt = T1 // tq

    assert mask.shape[0] == B and mask.shape[2] == T2 and mask.shape[1] in (1, T1)
    mask_is_row = mask.shape[1] == 1
    pos_b0 = pos_emb.shape[0] == 1      # pos_emb batch broadcast (usual conformer case)

    # (H, d_k) pos biases -> (H, 1, d_k) so each head's bias is a clean (1, d_k) block.
    pbu = pos_bias_u.reshape(n_head, 1, d_k)
    pbv = pos_bias_v.reshape(n_head, 1, d_k)

    sq = pl.Squeezed()

    q_spec   = pl.BlockSpec((sq, tq, F), lambda b, qi, h: (b, qi, 0))
    kv_spec  = pl.BlockSpec((sq, T2, F), lambda b, qi, h: (b, 0, 0))
    pos_spec = pl.BlockSpec((sq, T2, F),
                            (lambda b, qi, h: (0, 0, 0)) if pos_b0
                            else (lambda b, qi, h: (b, 0, 0)))
    if mask_is_row:
        mask_spec = pl.BlockSpec((sq, 1, T2), lambda b, qi, h: (b, 0, 0))
    else:
        mask_spec = pl.BlockSpec((sq, tq, T2), lambda b, qi, h: (b, qi, 0))

    w_head = lambda: pl.BlockSpec((F, d_k), lambda b, qi, h: (0, h))   # per-head weight columns
    b_head = lambda: pl.BlockSpec((1, d_k), lambda b, qi, h: (0, h))   # per-head bias slice
    pb_spec = lambda: pl.BlockSpec((sq, 1, d_k), lambda b, qi, h: (h, 0, 0))
    wo_spec = pl.BlockSpec((d_k, F), lambda b, qi, h: (h, 0))          # per-head out-proj rows
    bo_spec = pl.BlockSpec((1, F), lambda b, qi, h: (0, 0))

    return pl.pallas_call(
        rel_mha_kernel,
        out_shape=jax.ShapeDtypeStruct((B, T1, F), query.dtype),
        grid_spec=pltpu.PrefetchScalarGridSpec(
            num_scalar_prefetch=0,
            grid=(B, n_qt, n_head),
            in_specs=[
                q_spec, kv_spec, kv_spec, pos_spec, mask_spec,
                w_head(), b_head(),      # Wq, bq
                w_head(), b_head(),      # Wk, bk
                w_head(), b_head(),      # Wv, bv
                w_head(),                # Wp (linear_pos has no bias)
                pb_spec(), pb_spec(),    # pos_bias_u, pos_bias_v
                wo_spec, bo_spec,        # Wo, bo
            ],
            out_specs=pl.BlockSpec((sq, tq, F), lambda b, qi, h: (b, qi, 0)),
            scratch_shapes=[pltpu.VMEM((tq, F), jnp.float32)],
        ),
        compiler_params=pltpu.CompilerParams(
            dimension_semantics=("parallel", "parallel", "arbitrary")),
    )(query, key, value, pos_emb, mask,
      wq, bq, wk, bk, wv, bv, wp, pbu, pbv, wo, bo)


def reference_rel_mha(query, key, value, mask, pos_emb, params, n_head):
    """Pure-JAX mirror of the PyTorch RelPositionMultiHeadedAttention.forward (eval mode)."""
    B, T1, F = query.shape
    d_k = F // n_head
    (wq, bq, wk, bk, wv, bv, wp, wo, bo, pbu, pbv) = params
    hp = lax.Precision.HIGHEST

    def split_heads(x):
        return x.reshape(x.shape[0], -1, n_head, d_k).transpose(0, 2, 1, 3)

    q = split_heads(jnp.dot(query, wq, precision=hp) + bq)    # (B,H,T1,dk)
    k = split_heads(jnp.dot(key, wk, precision=hp) + bk)      # (B,H,T2,dk)
    v = split_heads(jnp.dot(value, wv, precision=hp) + bv)    # (B,H,T2,dk)
    p = split_heads(jnp.dot(pos_emb, wp, precision=hp))       # (1|B,H,T2,dk)
    p = jnp.broadcast_to(p, (B,) + p.shape[1:])

    q_t = q.transpose(0, 2, 1, 3)                             # (B,T1,H,dk)
    q_u = (q_t + pbu).transpose(0, 2, 1, 3)                   # (B,H,T1,dk)
    q_v = (q_t + pbv).transpose(0, 2, 1, 3)

    ac = jnp.einsum("bhqd,bhkd->bhqk", q_u, k, precision=hp)
    bd = jnp.einsum("bhqd,bhkd->bhqk", q_v, p, precision=hp)
    scores = (ac + bd) / math.sqrt(d_k)

    m = (mask[:, None, :, :] == 0)                            # (B,1,1|T1,T2)
    scores = jnp.where(m, -jnp.inf, scores)
    attn = jax.nn.softmax(scores, axis=-1)
    attn = jnp.where(m, 0.0, attn)
    x = jnp.einsum("bhqk,bhkd->bhqd", attn, v, precision=hp)
    x = x.transpose(0, 2, 1, 3).reshape(B, T1, F)
    return jnp.dot(x, wo, precision=hp) + bo


if __name__ == "__main__":
    B, T1, T2 = 2, 16, 16
    n_head, d_k = 2, 128
    n_feat = n_head * d_k            # 256 -> per-head blocks are lane-aligned (d_k multiple of 128)

    root = jax.random.PRNGKey(0)
    keys = jax.random.split(root, 12)

    query = jax.random.normal(keys[0], (B, T1, n_feat), dtype=jnp.float32)
    key_t = jax.random.normal(keys[1], (B, T2, n_feat), dtype=jnp.float32)
    value = jax.random.normal(keys[2], (B, T2, n_feat), dtype=jnp.float32)
    pos_emb = jax.random.normal(keys[3], (1, T2, n_feat), dtype=jnp.float32)

    bound = 1.0 / math.sqrt(n_feat)

    def make_linear(k, with_bias=True):
        kw, kb = jax.random.split(k)
        w = jax.random.uniform(kw, (n_feat, n_feat), jnp.float32, -bound, bound)   # stored (in, out)
        b = jax.random.uniform(kb, (1, n_feat), jnp.float32, -bound, bound) if with_bias else None
        return w, b

    wq, bq = make_linear(keys[4])
    wk, bk = make_linear(keys[5])
    wv, bv = make_linear(keys[6])
    wo, bo = make_linear(keys[7])
    wp, _ = make_linear(keys[8], with_bias=False)
    xav = math.sqrt(6.0 / (n_head + d_k))
    pos_bias_u = jax.random.uniform(keys[9], (n_head, d_k), jnp.float32, -xav, xav)
    pos_bias_v = jax.random.uniform(keys[10], (n_head, d_k), jnp.float32, -xav, xav)
    params = (wq, bq, wk, bk, wv, bv, wp, wo, bo, pos_bias_u, pos_bias_v)

    # Case 1: (B, 1, T2) padding mask (batch 1 has its last 3 key positions masked out).
    pad_mask = jnp.ones((B, 1, T2), dtype=jnp.int32).at[1, 0, T2 - 3:].set(0)
    # Case 2: (B, T1, T2) causal mask.
    causal_mask = jnp.broadcast_to(jnp.tril(jnp.ones((T1, T2), dtype=jnp.int32)), (B, T1, T2))

    for mask in (pad_mask, causal_mask):
        out = rel_position_mha(query, key_t, value, mask, pos_emb, params, n_head, tq=8)
        out = jax.block_until_ready(out)
        ref = reference_rel_mha(query, key_t, value, mask, pos_emb, params, n_head)
        assert out.shape == (B, T1, n_feat)
        max_err = float(jnp.max(jnp.abs(out - ref)))
        # Tolerance accounts for f32-on-MXU multi-pass matmuls inside the kernel vs XLA HIGHEST.
        assert jnp.allclose(out, ref, atol=1e-3, rtol=1e-3), max_err

    print("KERNEL_OK")
</pallas_src>

<mosaic_0001>
module attributes {stable_mosaic.version = 11 : i64} {
  func.func @rel_mha_kernel(%arg0: i32, %arg1: i32, %arg2: i32, %arg3: memref<1x8x256xf32, #tpu.memory_space<vmem>>, %arg4: memref<1x16x256xf32, #tpu.memory_space<vmem>>, %arg5: memref<1x16x256xf32, #tpu.memory_space<vmem>>, %arg6: memref<1x16x256xf32, #tpu.memory_space<vmem>>, %arg7: memref<1x1x16xi32, #tpu.memory_space<vmem>>, %arg8: memref<256x128xf32, #tpu.memory_space<vmem>>, %arg9: memref<1x128xf32, #tpu.memory_space<vmem>>, %arg10: memref<256x128xf32, #tpu.memory_space<vmem>>, %arg11: memref<1x128xf32, #tpu.memory_space<vmem>>, %arg12: memref<256x128xf32, #tpu.memory_space<vmem>>, %arg13: memref<1x128xf32, #tpu.memory_space<vmem>>, %arg14: memref<256x128xf32, #tpu.memory_space<vmem>>, %arg15: memref<1x1x128xf32, #tpu.memory_space<vmem>>, %arg16: memref<1x1x128xf32, #tpu.memory_space<vmem>>, %arg17: memref<128x256xf32, #tpu.memory_space<vmem>>, %arg18: memref<1x256xf32, #tpu.memory_space<vmem>>, %arg19: memref<1x8x256xf32, #tpu.memory_space<vmem>>, %arg20: memref<8x256xf32, #tpu.memory_space<vmem>>) attributes {dimension_semantics = [#tpu.dimension_semantics<parallel>, #tpu.dimension_semantics<parallel>, #tpu.dimension_semantics<arbitrary>], iteration_bounds = array<i64: 2, 2, 2>, scalar_prefetch = 0 : i64, scratch_operands = 1 : i64, tpu.core_type = #tpu.core_type<tc>, window_params = [{transform_indices = @transform_0, window_bounds = array<i64: 1, 8, 256>}, {transform_indices = @transform_1, window_bounds = array<i64: 1, 16, 256>}, {transform_indices = @transform_2, window_bounds = array<i64: 1, 16, 256>}, {pipeline_mode = #tpu.pipeline_mode<synchronous>, transform_indices = @transform_3, window_bounds = array<i64: 1, 16, 256>}, {transform_indices = @transform_4, window_bounds = array<i64: 1, 1, 16>}, {transform_indices = @transform_5, window_bounds = array<i64: 256, 128>}, {transform_indices = @transform_6, window_bounds = array<i64: 1, 128>}, {transform_indices = @transform_7, window_bounds = array<i64: 256, 128>}, {transform_indices = @transform_8, window_bounds = array<i64: 1, 128>}, {transform_indices = @transform_9, window_bounds = array<i64: 256, 128>}, {transform_indices = @transform_10, window_bounds = array<i64: 1, 128>}, {transform_indices = @transform_11, window_bounds = array<i64: 256, 128>}, {transform_indices = @transform_12, window_bounds = array<i64: 1, 1, 128>}, {transform_indices = @transform_13, window_bounds = array<i64: 1, 1, 128>}, {transform_indices = @transform_14, window_bounds = array<i64: 128, 256>}, {pipeline_mode = #tpu.pipeline_mode<synchronous>, transform_indices = @transform_15, window_bounds = array<i64: 1, 256>}, {transform_indices = @transform_16, window_bounds = array<i64: 1, 8, 256>}]} {
    %c0_i32 = arith.constant 0 : i32
    %0 = arith.cmpi eq, %arg2, %c0_i32 : i32
    %1 = arith.extui %0 : i1 to i32
    %c0_i32_0 = arith.constant 0 : i32
    %2 = arith.cmpi ne, %1, %c0_i32_0 : i32
    scf.if %2 {
      %cst_57 = arith.constant 0.000000e+00 : f32
      %77 = vector.broadcast %cst_57 : f32 to vector<8x256xf32>
      %c0_58 = arith.constant 0 : index
      %c0_59 = arith.constant 0 : index
      %78 = vector.load %arg20[%c0_58, %c0_59] : memref<8x256xf32, #tpu.memory_space<vmem>>, vector<8x256xf32>
      tpu.vector_store %arg20[%c0_58, %c0_59], %77 {strides = array<i32>} : memref<8x256xf32, #tpu.memory_space<vmem>>, vector<8x256xf32>,
    } else {
    }
    %c0 = arith.constant 0 : index
    %c0_1 = arith.constant 0 : index
    %c0_2 = arith.constant 0 : index
    %3 = vector.load %arg3[%c0, %c0_1, %c0_2] : memref<1x8x256xf32, #tpu.memory_space<vmem>>, vector<1x8x256xf32>
    %4 = vector.shape_cast %3 : vector<1x8x256xf32> to vector<8x256xf32>
    %c0_3 = arith.constant 0 : index
    %c0_4 = arith.constant 0 : index
    %5 = vector.load %arg8[%c0_3, %c0_4] : memref<256x128xf32, #tpu.memory_space<vmem>>, vector<256x128xf32>
    %cst = arith.constant dense<0.000000e+00> : vector<8x128xf32>
    %6 = tpu.matmul %4, %5, %cst {dimension_numbers = #tpu.dot_dimension_numbers<[1], [0], [0], [1], [0, 0, 1, 1], [], []>} : vector<8x256xf32>, vector<256x128xf32>, vector<8x128xf32> -> vector<8x128xf32>
    %c0_5 = arith.constant 0 : index
    %c0_6 = arith.constant 0 : index
    %7 = vector.load %arg9[%c0_5, %c0_6] : memref<1x128xf32, #tpu.memory_space<vmem>>, vector<1x128xf32>
    %8 = vector.broadcast %7 : vector<1x128xf32> to vector<8x128xf32>
    %9 = arith.addf %6, %8 : vector<8x128xf32>
    %c0_7 = arith.constant 0 : index
    %c0_8 = arith.constant 0 : index
    %c0_9 = arith.constant 0 : index
    %10 = vector.load %arg4[%c0_7, %c0_8, %c0_9] : memref<1x16x256xf32, #tpu.memory_space<vmem>>, vector<1x16x256xf32>
    %11 = vector.shape_cast %10 : vector<1x16x256xf32> to vector<16x256xf32>
    %c0_10 = arith.constant 0 : index
    %c0_11 = arith.constant 0 : index
    %12 = vector.load %arg10[%c0_10, %c0_11] : memref<256x128xf32, #tpu.memory_space<vmem>>, vector<256x128xf32>
    %cst_12 = arith.constant dense<0.000000e+00> : vector<16x128xf32>
    %13 = tpu.matmul %11, %12, %cst_12 {dimension_numbers = #tpu.dot_dimension_numbers<[1], [0], [0], [1], [0, 0, 1, 1], [], []>} : vector<16x256xf32>, vector<256x128xf32>, vector<16x128xf32> -> vector<16x128xf32>
    %c0_13 = arith.constant 0 : index
    %c0_14 = arith.constant 0 : index
    %14 = vector.load %arg11[%c0_13, %c0_14] : memref<1x128xf32, #tpu.memory_space<vmem>>, vector<1x128xf32>
    %15 = vector.broadcast %14 : vector<1x128xf32> to vector<16x128xf32>
    %16 = arith.addf %13, %15 : vector<16x128xf32>
    %c0_15 = arith.constant 0 : index
    %c0_16 = arith.constant 0 : index
    %c0_17 = arith.constant 0 : index
    %17 = vector.load %arg5[%c0_15, %c0_16, %c0_17] : memref<1x16x256xf32, #tpu.memory_space<vmem>>, vector<1x16x256xf32>
    %18 = vector.shape_cast %17 : vector<1x16x256xf32> to vector<16x256xf32>
    %c0_18 = arith.constant 0 : index
    %c0_19 = arith.constant 0 : index
    %19 = vector.load %arg12[%c0_18, %c0_19] : memref<256x128xf32, #tpu.memory_space<vmem>>, vector<256x128xf32>
    %cst_20 = arith.constant dense<0.000000e+00> : vector<16x128xf32>
    %20 = tpu.matmul %18, %19, %cst_20 {dimension_numbers = #tpu.dot_dimension_numbers<[1], [0], [0], [1], [0, 0, 1, 1], [], []>} : vector<16x256xf32>, vector<256x128xf32>, vector<16x128xf32> -> vector<16x128xf32>
    %c0_21 = arith.constant 0 : index
    %c0_22 = arith.constant 0 : index
    %21 = vector.load %arg13[%c0_21, %c0_22] : memref<1x128xf32, #tpu.memory_space<vmem>>, vector<1x128xf32>
    %22 = vector.broadcast %21 : vector<1x128xf32> to vector<16x128xf32>
    %23 = arith.addf %20, %22 : vector<16x128xf32>
    %c0_23 = arith.constant 0 : index
    %c0_24 = arith.constant 0 : index
    %c0_25 = arith.constant 0 : index
    %24 = vector.load %arg6[%c0_23, %c0_24, %c0_25] : memref<1x16x256xf32, #tpu.memory_space<vmem>>, vector<1x16x256xf32>
    %25 = vector.shape_cast %24 : vector<1x16x256xf32> to vector<16x256xf32>
    %c0_26 = arith.constant 0 : index
    %c0_27 = arith.constant 0 : index
    %26 = vector.load %arg14[%c0_26, %c0_27] : memref<256x128xf32, #tpu.memory_space<vmem>>, vector<256x128xf32>
    %cst_28 = arith.constant dense<0.000000e+00> : vector<16x128xf32>
    %27 = tpu.matmul %25, %26, %cst_28 {dimension_numbers = #tpu.dot_dimension_numbers<[1], [0], [0], [1], [0, 0, 1, 1], [], []>} : vector<16x256xf32>, vector<256x128xf32>, vector<16x128xf32> -> vector<16x128xf32>
    %c0_29 = arith.constant 0 : index
    %c0_30 = arith.constant 0 : index
    %c0_31 = arith.constant 0 : index
    %28 = vector.load %arg15[%c0_29, %c0_30, %c0_31] : memref<1x1x128xf32, #tpu.memory_space<vmem>>, vector<1x1x128xf32>
    %29 = vector.shape_cast %28 : vector<1x1x128xf32> to vector<1x128xf32>
    %30 = vector.broadcast %29 : vector<1x128xf32> to vector<8x128xf32>
    %31 = arith.addf %9, %30 : vector<8x128xf32>
    %cst_32 = arith.constant 0.0883883461 : f32
    %32 = vector.broadcast %cst_32 : f32 to vector<8x128xf32>
    %33 = arith.mulf %31, %32 : vector<8x128xf32>
    %c0_33 = arith.constant 0 : index
    %c0_34 = arith.constant 0 : index
    %c0_35 = arith.constant 0 : index
    %34 = vector.load %arg16[%c0_33, %c0_34, %c0_35] : memref<1x1x128xf32, #tpu.memory_space<vmem>>, vector<1x1x128xf32>
    %35 = vector.shape_cast %34 : vector<1x1x128xf32> to vector<1x128xf32>
    %36 = vector.broadcast %35 : vector<1x128xf32> to vector<8x128xf32>
    %37 = arith.addf %9, %36 : vector<8x128xf32>
    %cst_36 = arith.constant 0.0883883461 : f32
    %38 = vector.broadcast %cst_36 : f32 to vector<8x128xf32>
    %39 = arith.mulf %37, %38 : vector<8x128xf32>
    %cst_37 = arith.constant dense<0.000000e+00> : vector<8x16xf32>
    %40 = tpu.matmul %33, %16, %cst_37 {dimension_numbers = #tpu.dot_dimension_numbers<[1], [1], [0], [0], [0, 0, 1, 0], [], []>} : vector<8x128xf32>, vector<16x128xf32>, vector<8x16xf32> -> vector<8x16xf32>
    %cst_38 = arith.constant dense<0.000000e+00> : vector<8x16xf32>
    %41 = tpu.matmul %39, %27, %cst_38 {dimension_numbers = #tpu.dot_dimension_numbers<[1], [1], [0], [0], [0, 0, 1, 0], [], []>} : vector<8x128xf32>, vector<16x128xf32>, vector<8x16xf32> -> vector<8x16xf32>
    %42 = arith.addf %40, %41 : vector<8x16xf32>
    %c0_39 = arith.constant 0 : index
    %c0_40 = arith.constant 0 : index
    %c0_41 = arith.constant 0 : index
    %43 = vector.load %arg7[%c0_39, %c0_40, %c0_41] : memref<1x1x16xi32, #tpu.memory_space<vmem>>, vector<1x1x16xi32>
    %44 = vector.shape_cast %43 : vector<1x1x16xi32> to vector<1x16xi32>
    %c0_i32_42 = arith.constant 0 : i32
    %45 = vector.broadcast %c0_i32_42 : i32 to vector<1x16xi32>
    %46 = arith.cmpi eq, %44, %45 : vector<1x16xi32>
    %cst_43 = arith.constant -1.000000e+30 : f32
    %cst_44 = arith.constant 0.000000e+00 : f32
    %47 = vector.broadcast %cst_43 : f32 to vector<1x16xf32>
    %48 = vector.broadcast %cst_44 : f32 to vector<1x16xf32>
    %49 = arith.select %46, %47, %48 : vector<1x16xi1>, vector<1x16xf32>
    %50 = vector.broadcast %49 : vector<1x16xf32> to vector<8x16xf32>
    %51 = arith.addf %42, %50 : vector<8x16xf32>
    %cst_45 = arith.constant dense<0xFF800000> : vector<8xf32>
    %52 = vector.multi_reduction <maximumf>, %51, %cst_45 [1] : vector<8x16xf32> to vector<8xf32>
    %53 = vector.shape_cast %52 : vector<8xf32> to vector<8x1xf32>
    %54 = vector.broadcast %53 : vector<8x1xf32> to vector<8x16xf32>
    %55 = arith.subf %51, %54 : vector<8x16xf32>
    %56 = math.exp %55 : vector<8x16xf32>
    %cst_46 = arith.constant dense<0.000000e+00> : vector<8xf32>
    %57 = vector.multi_reduction <add>, %56, %cst_46 [1] : vector<8x16xf32> to vector<8xf32>
    %58 = vector.shape_cast %57 : vector<8xf32> to vector<8x1xf32>
    %59 = tpu.reciprocal %58 : vector<8x1xf32> -> vector<8x1xf32>
    %60 = vector.broadcast %59 : vector<8x1xf32> to vector<8x16xf32>
    %61 = arith.mulf %56, %60 : vector<8x16xf32>
    %62 = arith.extui %46 : vector<1x16xi1> to vector<1x16xi32>
    %63 = arith.sitofp %62 : vector<1x16xi32> to vector<1x16xf32>
    %cst_47 = arith.constant 1.000000e+00 : f32
    %64 = vector.broadcast %cst_47 : f32 to vector<1x16xf32>
    %65 = arith.subf %64, %63 : vector<1x16xf32>
    %66 = vector.broadcast %65 : vector<1x16xf32> to vector<8x16xf32>
    %67 = arith.mulf %61, %66 : vector<8x16xf32>
    %cst_48 = arith.constant dense<0.000000e+00> : vector<8x128xf32>
    %68 = tpu.matmul %67, %23, %cst_48 {dimension_numbers = #tpu.dot_dimension_numbers<[1], [0], [0], [1], [0, 0, 1, 1], [], []>} : vector<8x16xf32>, vector<16x128xf32>, vector<8x128xf32> -> vector<8x128xf32>
    %c0_49 = arith.constant 0 : index
    %c0_50 = arith.constant 0 : index
    %69 = vector.load %arg20[%c0_49, %c0_50] : memref<8x256xf32, #tpu.memory_space<vmem>>, vector<8x256xf32>
    %c0_51 = arith.constant 0 : index
    %c0_52 = arith.constant 0 : index
    %70 = vector.load %arg17[%c0_51, %c0_52] : memref<128x256xf32, #tpu.memory_space<vmem>>, vector<128x256xf32>
    %cst_53 = arith.constant dense<0.000000e+00> : vector<8x256xf32>
    %71 = tpu.matmul %68, %70, %cst_53 {dimension_numbers = #tpu.dot_dimension_numbers<[1], [0], [0], [1], [0, 0, 1, 1], [], []>} : vector<8x128xf32>, vector<128x256xf32>, vector<8x256xf32> -> vector<8x256xf32>
    %72 = arith.addf %69, %71 : vector<8x256xf32>
    %c0_54 = arith.constant 0 : index
    %c0_55 = arith.constant 0 : index
    %73 = vector.load %arg20[%c0_54, %c0_55] : memref<8x256xf32, #tpu.memory_space<vmem>>, vector<8x256xf32>
    tpu.vector_store %arg20[%c0_54, %c0_55], %72 {strides = array<i32>} : memref<8x256xf32, #tpu.memory_space<vmem>>, vector<8x256xf32>,
    %c1_i32 = arith.constant 1 : i32
    %74 = arith.cmpi eq, %arg2, %c1_i32 : i32
    %75 = arith.extui %74 : i1 to i32
    %c0_i32_56 = arith.constant 0 : i32
    %76 = arith.cmpi ne, %75, %c0_i32_56 : i32
    scf.if %76 {
      %c0_57 = arith.constant 0 : index
      %c0_58 = arith.constant 0 : index
      %77 = vector.load %arg20[%c0_57, %c0_58] : memref<8x256xf32, #tpu.memory_space<vmem>>, vector<8x256xf32>
      %c0_59 = arith.constant 0 : index
      %c0_60 = arith.constant 0 : index
      %78 = vector.load %arg18[%c0_59, %c0_60] : memref<1x256xf32, #tpu.memory_space<vmem>>, vector<1x256xf32>
      %79 = vector.broadcast %78 : vector<1x256xf32> to vector<8x256xf32>
      %80 = arith.addf %77, %79 : vector<8x256xf32>
      %c0_61 = arith.constant 0 : index
      %c0_62 = arith.constant 0 : index
      %c0_63 = arith.constant 0 : index
      %81 = vector.load %arg19[%c0_61, %c0_62, %c0_63] : memref<1x8x256xf32, #tpu.memory_space<vmem>>, vector<1x8x256xf32>
      %82 = vector.shape_cast %81 : vector<1x8x256xf32> to vector<8x256xf32>
      %83 = vector.shape_cast %80 : vector<8x256xf32> to vector<1x8x256xf32>
      tpu.vector_store %arg19[%c0_61, %c0_62, %c0_63], %83 {strides = array<i32>} : memref<1x8x256xf32, #tpu.memory_space<vmem>>, vector<1x8x256xf32>,
    } else {
    }
    return
  }
  func.func @transform_0(%arg0: i32, %arg1: i32, %arg2: i32) -> (i32, i32, i32) {
    %c0_i32 = arith.constant 0 : i32
    %c0_i32_0 = arith.constant 0 : i32
    return %arg0, %arg1, %c0_i32 : i32, i32, i32
  }
  func.func @transform_1(%arg0: i32, %arg1: i32, %arg2: i32) -> (i32, i32, i32) {
    %c0_i32 = arith.constant 0 : i32
    %c0_i32_0 = arith.constant 0 : i32
    %c0_i32_1 = arith.constant 0 : i32
    return %arg0, %c0_i32, %c0_i32_0 : i32, i32, i32
  }
  func.func @transform_2(%arg0: i32, %arg1: i32, %arg2: i32) -> (i32, i32, i32) {
    %c0_i32 = arith.constant 0 : i32
    %c0_i32_0 = arith.constant 0 : i32
    %c0_i32_1 = arith.constant 0 : i32
    return %arg0, %c0_i32, %c0_i32_0 : i32, i32, i32
  }
  func.func @transform_3(%arg0: i32, %arg1: i32, %arg2: i32) -> (i32, i32, i32) {
    %c0_i32 = arith.constant 0 : i32
    %c0_i32_0 = arith.constant 0 : i32
    %c0_i32_1 = arith.constant 0 : i32
    %c0_i32_2 = arith.constant 0 : i32
    return %c0_i32, %c0_i32_0, %c0_i32_1 : i32, i32, i32
  }
  func.func @transform_4(%arg0: i32, %arg1: i32, %arg2: i32) -> (i32, i32, i32) {
    %c0_i32 = arith.constant 0 : i32
    %c0_i32_0 = arith.constant 0 : i32
    %c0_i32_1 = arith.constant 0 : i32
    return %arg0, %c0_i32, %c0_i32_0 : i32, i32, i32
  }
  func.func @transform_5(%arg0: i32, %arg1: i32, %arg2: i32) -> (i32, i32) {
    %c0_i32 = arith.constant 0 : i32
    %c0_i32_0 = arith.constant 0 : i32
    return %c0_i32, %arg2 : i32, i32
  }
  func.func @transform_6(%arg0: i32, %arg1: i32, %arg2: i32) -> (i32, i32) {
    %c0_i32 = arith.constant 0 : i32
    %c0_i32_0 = arith.constant 0 : i32
    return %c0_i32, %arg2 : i32, i32
  }
  func.func @transform_7(%arg0: i32, %arg1: i32, %arg2: i32) -> (i32, i32) {
    %c0_i32 = arith.constant 0 : i32
    %c0_i32_0 = arith.constant 0 : i32
    return %c0_i32, %arg2 : i32, i32
  }
  func.func @transform_8(%arg0: i32, %arg1: i32, %arg2: i32) -> (i32, i32) {
    %c0_i32 = arith.constant 0 : i32
    %c0_i32_0 = arith.constant 0 : i32
    return %c0_i32, %arg2 : i32, i32
  }
  func.func @transform_9(%arg0: i32, %arg1: i32, %arg2: i32) -> (i32, i32) {
    %c0_i32 = arith.constant 0 : i32
    %c0_i32_0 = arith.constant 0 : i32
    return %c0_i32, %arg2 : i32, i32
  }
  func.func @transform_10(%arg0: i32, %arg1: i32, %arg2: i32) -> (i32, i32) {
    %c0_i32 = arith.constant 0 : i32
    %c0_i32_0 = arith.constant 0 : i32
    return %c0_i32, %arg2 : i32, i32
  }
  func.func @transform_11(%arg0: i32, %arg1: i32, %arg2: i32) -> (i32, i32) {
    %c0_i32 = arith.constant 0 : i32
    %c0_i32_0 = arith.constant 0 : i32
    return %c0_i32, %arg2 : i32, i32
  }
  func.func @transform_12(%arg0: i32, %arg1: i32, %arg2: i32) -> (i32, i32, i32) {
    %c0_i32 = arith.constant 0 : i32
    %c0_i32_0 = arith.constant 0 : i32
    %c0_i32_1 = arith.constant 0 : i32
    return %arg2, %c0_i32, %c0_i32_0 : i32, i32, i32
  }
  func.func @transform_13(%arg0: i32, %arg1: i32, %arg2: i32) -> (i32, i32, i32) {
    %c0_i32 = arith.constant 0 : i32
    %c0_i32_0 = arith.constant 0 : i32
    %c0_i32_1 = arith.constant 0 : i32
    return %arg2, %c0_i32, %c0_i32_0 : i32, i32, i32
  }
  func.func @transform_14(%arg0: i32, %arg1: i32, %arg2: i32) -> (i32, i32) {
    %c0_i32 = arith.constant 0 : i32
    %c0_i32_0 = arith.constant 0 : i32
    return %arg2, %c0_i32 : i32, i32
  }
  func.func @transform_15(%arg0: i32, %arg1: i32, %arg2: i32) -> (i32, i32) {
    %c0_i32 = arith.constant 0 : i32
    %c0_i32_0 = arith.constant 0 : i32
    %c0_i32_1 = arith.constant 0 : i32
    return %c0_i32, %c0_i32_0 : i32, i32
  }
  func.func @transform_16(%arg0: i32, %arg1: i32, %arg2: i32) -> (i32, i32, i32) {
    %c0_i32 = arith.constant 0 : i32
    %c0_i32_0 = arith.constant 0 : i32
    return %arg0, %arg1, %c0_i32 : i32, i32, i32
  }
}

</mosaic_0001>

<llo_original>
// kernel: tpu_custom_call.1
$region0: #{tpu_custom_call.1}
  #allocation0 [shape = 'u32[]', space=smem, size = 0x4, offset = 0x4, fixed_abs, tag = 'smem constant byte address 0x4 - core index']
  #allocation1 [shape = 'u32[144,128]{1,0:T(1,128)}', space=vmem, size = 0x12000, scoped, tag = 'internal scratch']
  #allocation2 [shape = 'f32[8,256]{1,0:T(8,128)}', space=vmem, size = 0x2000, scoped, tag = 'scratch operand']
  %s0 = inlined_call_operand.hbm [shape: f32[2,16,256], index: 0, kind: input, shape index: {}]
  %s1 = inlined_call_operand.hbm [shape: f32[2,16,256], index: 1, kind: input, shape index: {}]
  %s2 = inlined_call_operand.hbm [shape: f32[2,16,256], index: 2, kind: input, shape index: {}]
  %s3 = inlined_call_operand.hbm [shape: f32[1,16,256], index: 3, kind: input, shape index: {}]
  %s4 = inlined_call_operand.vmem [shape: s32[2,1,16], index: 4, kind: input, shape index: {}]
  %s5 = inlined_call_operand.hbm [shape: f32[256,256], index: 5, kind: input, shape index: {}]
  %s6 = inlined_call_operand.vmem [shape: f32[1,256], index: 6, kind: input, shape index: {}]
  %s7 = inlined_call_operand.hbm [shape: f32[256,256], index: 7, kind: input, shape index: {}]
  %s8 = inlined_call_operand.vmem [shape: f32[1,256], index: 8, kind: input, shape index: {}]
  %s9 = inlined_call_operand.hbm [shape: f32[256,256], index: 9, kind: input, shape index: {}]
  %s10 = inlined_call_operand.vmem [shape: f32[1,256], index: 10, kind: input, shape index: {}]
  %s11 = inlined_call_operand.hbm [shape: f32[256,256], index: 11, kind: input, shape index: {}]
  %s12 = inlined_call_operand.vmem [shape: f32[2,1,128], index: 12, kind: input, shape index: {}]
  %s13 = inlined_call_operand.vmem [shape: f32[2,1,128], index: 13, kind: input, shape index: {}]
  %s14 = inlined_call_operand.hbm [shape: f32[256,256], index: 14, kind: input, shape index: {}]
  %s15 = inlined_call_operand.vmem [shape: f32[1,256], index: 15, kind: input, shape index: {}]
  %s16 = inlined_call_operand.hbm [shape: f32[2,16,256], index: 16, kind: output, shape index: {}]
  %s17 = sld [smem:[#allocation0]]
  $region141: #{tpu_custom_call.1} parent=0
    _
  %s19 = ssub.s32 1, %s17
  %s20 = scalar_select 0, %s19, %s17
  $region1: #{tpu_custom_call.1} parent=0
    #allocation3 [shape = 'u8[16384]{0}', space=vmem, size = 0x4000, scoped, tag = 'input window, operand 0']
    #allocation4 [shape = 's32[2]{0}', space=sflag, size = 0x8, scoped, tag = 'scoped memory for tpu_custom_call.1']
    #allocation5 [shape = 's32[2]{0}', space=sflag, size = 0x8, scoped, tag = 'scoped memory for tpu_custom_call.1']
    #allocation6 [shape = 'u8[32768]{0}', space=vmem, size = 0x8000, scoped, tag = 'input window, operand 1']
    #allocation7 [shape = 's32[2]{0}', space=sflag, size = 0x8, scoped, tag = 'scoped memory for tpu_custom_call.1']
    #allocation8 [shape = 'u8[32768]{0}', space=vmem, size = 0x8000, scoped, tag = 'input window, operand 2']
    #allocation9 [shape = 'u8[16384]{0}', space=vmem, size = 0x4000, scoped, tag = 'input window, operand 3, single buffered']
    #allocation10 [shape = 's32[1]{0}', space=sflag, size = 0x4, scoped, tag = 'scoped memory for tpu_custom_call.1']
    #allocation11 [shape = 'u8[262144]{0}', space=vmem, size = 0x40000, scoped, tag = 'input window, operand 5']
    #allocation12 [shape = 'u8[262144]{0}', space=vmem, size = 0x40000, scoped, tag = 'input window, operand 7']
    #allocation13 [shape = 'u8[262144]{0}', space=vmem, size = 0x40000, scoped, tag = 'input window, operand 9']
    #allocation14 [shape = 'u8[262144]{0}', space=vmem, size = 0x40000, scoped, tag = 'input window, operand 11']
    #allocation15 [shape = 'u8[262144]{0}', space=vmem, size = 0x40000, scoped, tag = 'input window, operand 14']
    #allocation16 [shape = 'u8[16384]{0}', space=vmem, size = 0x4000, scoped, tag = 'output window, operand 0']
    %21 = vsyncpa [#allocation4], 0
    %s22 = scalar_lea.sflag [#allocation4], 1
    %23 = vsyncpa %s22, 0
    %24 = vsyncpa [#allocation7], 0
    %s25 = scalar_lea.sflag [#allocation7], 1
    %26 = vsyncpa %s25, 0
    %27 = vsyncpa [#allocation10], 0
    %28 = vsyncpa [#allocation5], 0
    %s29 = scalar_lea.sflag [#allocation5], 1
    %30 = vsyncpa %s29, 0
    loop: start=0, step=1, limit=10
    $region2: #{tpu_custom_call.1} parent=1 // loop_pre_header
      _
    $region3: #{tpu_custom_call.1} parent=1 // loop_header
      %s32 = sphi 0, %s36
      %p33 = scmp.ge.s32.totalorder %s32, 10
      %s39 = sphi 0, %s58
      %s40 = sphi 0, %s54
      %s41 = sphi 0, %s50
      %s42 = sphi 0, %s39
      %s43 = sphi 0, %s40
      %s44 = sphi 0, %s41
      %s45 = sphi 0, %s42
      %s46 = sphi 0, %s43
      %s47 = sphi 0, %s44
      %s63 = sphi 0, %s65
      %s66 = sphi 0, %s63
      %s67 = sphi 0, %s66
      %s83 = sphi 0, %s67
      %s89 = sphi 0, %s91
      %s92 = sphi 0, %s89
      %s93 = sphi 0, %s92
      %s109 = sphi 0, %s93
      %s115 = sphi 0, %s117
      %s118 = sphi 0, %s115
      %s119 = sphi 0, %s118
      %s135 = sphi 0, %s119
      %s139 = sphi 0, %s139
      %s141 = sphi 0, %s139
      %s142 = sphi 0, %s141
      %s156 = sphi 0, %s142
      %s162 = sphi 0, %s164
      %s165 = sphi 0, %s162
      %s166 = sphi 0, %s165
      %s182 = sphi 0, %s166
      %s188 = sphi 0, %s190
      %s191 = sphi 0, %s188
      %s192 = sphi 0, %s191
      %s208 = sphi 0, %s192
      %s214 = sphi 0, %s216
      %s217 = sphi 0, %s214
      %s218 = sphi 0, %s217
      %s234 = sphi 0, %s218
      %s240 = sphi 0, %s242
      %s243 = sphi 0, %s240
      %s244 = sphi 0, %s243
      %s260 = sphi 0, %s244
      %s266 = sphi 0, %s268
      %s269 = sphi 0, %s266
      %s270 = sphi 0, %s269
      %s286 = sphi 0, %s270
      %s292 = sphi 0, %s294
      %s295 = sphi 0, %s292
      %s296 = sphi 0, %s295
      %s312 = sphi 0, %s296
      %s318 = sphi 0, %s320
      %s321 = sphi 0, %s318
      %s322 = sphi 0, %s321
      %s338 = sphi 0, %s322
      %s344 = sphi 0, %s346
      %s347 = sphi 0, %s344
      %s348 = sphi 0, %s347
      %s364 = sphi 0, %s348
      %s370 = sphi 0, %s372
      %s373 = sphi 0, %s370
      %s374 = sphi 0, %s373
      %s390 = sphi 0, %s374
      %s396 = sphi 0, %s398
      %s399 = sphi 0, %s396
      %s400 = sphi 0, %s399
      %s416 = sphi 0, %s400
      %s422 = sphi 0, %s424
      %s425 = sphi 0, %s422
      %s426 = sphi 0, %s425
      %s442 = sphi 0, %s426
      %s446 = sphi 0, %s446
      %s448 = sphi 0, %s446
      %s449 = sphi 0, %s448
      %s463 = sphi 0, %s449
      %s471 = sphi 0, %s473
      %s474 = sphi 0, %s471
      %s475 = sphi 0, %s474
      %s491 = sphi 0, %s475
    $region4: #{tpu_custom_call.1} parent=1 // loop_header_branch
      %35 = sbr.rel (%p33) target = $region8
    $region5: #{tpu_custom_call.1} parent=1 // loop_body
      %s37 = ssub.s32 %s32, 1
      %s38 = ssub.s32 %s32, 2
      %s48 = sadd.s32 1, %s41
      %p49 = scmp.ge.s32.totalorder %s48, 2
      %s50 = scalar_select %p49, 0, %s48
      %s51 = sadd.s32 1, %s40
      %s52 = scalar_select %p49, %s51, %s40
      %p53 = scmp.ge.s32.totalorder %s52, 2
      %s54 = scalar_select %p53, 0, %s52
      %s55 = sadd.s32 1, %s39
      %s56 = scalar_select %p53, %s55, %s39
      %p57 = scmp.ge.s32.totalorder %s56, 2
      %s58 = scalar_select %p57, 0, %s56
      %s59 = ssub.s32 %s39, %s58
      %s60 = ssub.s32 %s40, %s54
      %s61 = sor.u32 %s59, %s60
      %p62 = scmp.eq.s32.totalorder %s61, 0
      %s64 = sadd.s32 %s63, 1
      %s65 = scalar_select %p62, %s63, %s64
      %p68 = pneg %p62
      %p69 = scmp.eq.s32.totalorder %s32, 7
      %p70 = por %p68, %p69
      %p71 = scmp.ne.s32.totalorder %s63, %s66
      %p72 = scmp.eq.s32.totalorder %s32, 0
      %p73 = por %p71, %p72
      %p74 = scmp.ne.s32.totalorder %s63, %s66
      %p75 = scmp.eq.s32.totalorder %s37, 7
      %p76 = por %p74, %p75
      %p77 = scmp.ne.s32.totalorder %s66, %s67
      %p78 = scmp.eq.s32.totalorder %s37, 0
      %p79 = por %p77, %p78
      %p80 = scmp.ne.s32.totalorder %s66, %s67
      %p81 = scmp.eq.s32.totalorder %s38, 7
      %p82 = por %p80, %p81
      %p84 = scmp.ne.s32.totalorder %s67, %s83
      %p85 = scmp.eq.s32.totalorder %s38, 0
      %p86 = por %p84, %p85
      %s87 = ssub.s32 %s39, %s58
      %p88 = scmp.eq.s32.totalorder %s87, 0
      %s90 = sadd.s32 %s89, 1
      %s91 = scalar_select %p88, %s89, %s90
      %p94 = pneg %p88
      %p95 = scmp.eq.s32.totalorder %s32, 7
      %p96 = por %p94, %p95
      %p97 = scmp.ne.s32.totalorder %s89, %s92
      %p98 = scmp.eq.s32.totalorder %s32, 0
      %p99 = por %p97, %p98
      %p100 = scmp.ne.s32.totalorder %s89, %s92
      %p101 = scmp.eq.s32.totalorder %s37, 7
      %p102 = por %p100, %p101
      %p103 = scmp.ne.s32.totalorder %s92, %s93
      %p104 = scmp.eq.s32.totalorder %s37, 0
      %p105 = por %p103, %p104
      %p106 = scmp.ne.s32.totalorder %s92, %s93
      %p107 = scmp.eq.s32.totalorder %s38, 7
      %p108 = por %p106, %p107
      %p110 = scmp.ne.s32.totalorder %s93, %s109
      %p111 = scmp.eq.s32.totalorder %s38, 0
      %p112 = por %p110, %p111
      %s113 = ssub.s32 %s39, %s58
      %p114 = scmp.eq.s32.totalorder %s113, 0
      %s116 = sadd.s32 %s115, 1
      %s117 = scalar_select %p114, %s115, %s116
      %p120 = pneg %p114
      %p121 = scmp.eq.s32.totalorder %s32, 7
      %p122 = por %p120, %p121
      %p123 = scmp.ne.s32.totalorder %s115, %s118
      %p124 = scmp.eq.s32.totalorder %s32, 0
      %p125 = por %p123, %p124
      %p126 = scmp.ne.s32.totalorder %s115, %s118
      %p127 = scmp.eq.s32.totalorder %s37, 7
      %p128 = por %p126, %p127
      %p129 = scmp.ne.s32.totalorder %s118, %s119
      %p130 = scmp.eq.s32.totalorder %s37, 0
      %p131 = por %p129, %p130
      %p132 = scmp.ne.s32.totalorder %s118, %s119
      %p133 = scmp.eq.s32.totalorder %s38, 7
      %p134 = por %p132, %p133
      %p136 = scmp.ne.s32.totalorder %s119, %s135
      %p137 = scmp.eq.s32.totalorder %s38, 0
      %p138 = por %p136, %p137
      %s140 = sadd.s32 %s139, 1
      %p143 = scmp.eq.s32.totalorder %s32, 7
      %p144 = scmp.ne.s32.totalorder %s139, %s141
      %p145 = scmp.eq.s32.totalorder %s32, 0
      %p146 = por %p144, %p145
      %p147 = scmp.ne.s32.totalorder %s139, %s141
      %p148 = scmp.eq.s32.totalorder %s37, 7
      %p149 = por %p147, %p148
      %p150 = scmp.ne.s32.totalorder %s141, %s142
      %p151 = scmp.eq.s32.totalorder %s37, 0
      %p152 = por %p150, %p151
      %p153 = scmp.ne.s32.totalorder %s141, %s142
      %p154 = scmp.eq.s32.totalorder %s38, 7
      %p155 = por %p153, %p154
      %p157 = scmp.ne.s32.totalorder %s142, %s156
      %p158 = scmp.eq.s32.totalorder %s38, 0
      %p159 = por %p157, %p158
      %s160 = ssub.s32 %s39, %s58
      %p161 = scmp.eq.s32.totalorder %s160, 0
      %s163 = sadd.s32 %s162, 1
      %s164 = scalar_select %p161, %s162, %s163
      %p167 = pneg %p161
      %p168 = scmp.eq.s32.totalorder %s32, 7
      %p169 = por %p167, %p168
      %p170 = scmp.ne.s32.totalorder %s162, %s165
      %p171 = scmp.eq.s32.totalorder %s32, 0
      %p172 = por %p170, %p171
      %p173 = scmp.ne.s32.totalorder %s162, %s165
      %p174 = scmp.eq.s32.totalorder %s37, 7
      %p175 = por %p173, %p174
      %p176 = scmp.ne.s32.totalorder %s165, %s166
      %p177 = scmp.eq.s32.totalorder %s37, 0
      %p178 = por %p176, %p177
      %p179 = scmp.ne.s32.totalorder %s165, %s166
      %p180 = scmp.eq.s32.totalorder %s38, 7
      %p181 = por %p179, %p180
      %p183 = scmp.ne.s32.totalorder %s166, %s182
      %p184 = scmp.eq.s32.totalorder %s38, 0
      %p185 = por %p183, %p184
      %s186 = ssub.s32 %s41, %s50
      %p187 = scmp.eq.s32.totalorder %s186, 0
      %s189 = sadd.s32 %s188, 1
      %s190 = scalar_select %p187, %s188, %s189
      %p193 = pneg %p187
      %p194 = scmp.eq.s32.totalorder %s32, 7
      %p195 = por %p193, %p194
      %p196 = scmp.ne.s32.totalorder %s188, %s191
      %p197 = scmp.eq.s32.totalorder %s32, 0
      %p198 = por %p196, %p197
      %p199 = scmp.ne.s32.totalorder %s188, %s191
      %p200 = scmp.eq.s32.totalorder %s37, 7
      %p201 = por %p199, %p200
      %p202 = scmp.ne.s32.totalorder %s191, %s192
      %p203 = scmp.eq.s32.totalorder %s37, 0
      %p204 = por %p202, %p203
      %p205 = scmp.ne.s32.totalorder %s191, %s192
      %p206 = scmp.eq.s32.totalorder %s38, 7
      %p207 = por %p205, %p206
      %p209 = scmp.ne.s32.totalorder %s192, %s208
      %p210 = scmp.eq.s32.totalorder %s38, 0
      %p211 = por %p209, %p210
      %s212 = ssub.s32 %s41, %s50
      %p213 = scmp.eq.s32.totalorder %s212, 0
      %s215 = sadd.s32 %s214, 1
      %s216 = scalar_select %p213, %s214, %s215
      %p219 = pneg %p213
      %p220 = scmp.eq.s32.totalorder %s32, 7
      %p221 = por %p219, %p220
      %p222 = scmp.ne.s32.totalorder %s214, %s217
      %p223 = scmp.eq.s32.totalorder %s32, 0
      %p224 = por %p222, %p223
      %p225 = scmp.ne.s32.totalorder %s214, %s217
      %p226 = scmp.eq.s32.totalorder %s37, 7
      %p227 = por %p225, %p226
      %p228 = scmp.ne.s32.totalorder %s217, %s218
      %p229 = scmp.eq.s32.totalorder %s37, 0
      %p230 = por %p228, %p229
      %p231 = scmp.ne.s32.totalorder %s217, %s218
      %p232 = scmp.eq.s32.totalorder %s38, 7
      %p233 = por %p231, %p232
      %p235 = scmp.ne.s32.totalorder %s218, %s234
      %p236 = scmp.eq.s32.totalorder %s38, 0
      %p237 = por %p235, %p236
      %s238 = ssub.s32 %s41, %s50
      %p239 = scmp.eq.s32.totalorder %s238, 0
      %s241 = sadd.s32 %s240, 1
      %s242 = scalar_select %p239, %s240, %s241
      %p245 = pneg %p239
      %p246 = scmp.eq.s32.totalorder %s32, 7
      %p247 = por %p245, %p246
      %p248 = scmp.ne.s32.totalorder %s240, %s243
      %p249 = scmp.eq.s32.totalorder %s32, 0
      %p250 = por %p248, %p249
      %p251 = scmp.ne.s32.totalorder %s240, %s243
      %p252 = scmp.eq.s32.totalorder %s37, 7
      %p253 = por %p251, %p252
      %p254 = scmp.ne.s32.totalorder %s243, %s244
      %p255 = scmp.eq.s32.totalorder %s37, 0
      %p256 = por %p254, %p255
      %p257 = scmp.ne.s32.totalorder %s243, %s244
      %p258 = scmp.eq.s32.totalorder %s38, 7
      %p259 = por %p257, %p258
      %p261 = scmp.ne.s32.totalorder %s244, %s260
      %p262 = scmp.eq.s32.totalorder %s38, 0
      %p263 = por %p261, %p262
      %s264 = ssub.s32 %s41, %s50
      %p265 = scmp.eq.s32.totalorder %s264, 0
      %s267 = sadd.s32 %s266, 1
      %s268 = scalar_select %p265, %s266, %s267
      %p271 = pneg %p265
      %p272 = scmp.eq.s32.totalorder %s32, 7
      %p273 = por %p271, %p272
      %p274 = scmp.ne.s32.totalorder %s266, %s269
      %p275 = scmp.eq.s32.totalorder %s32, 0
      %p276 = por %p274, %p275
      %p277 = scmp.ne.s32.totalorder %s266, %s269
      %p278 = scmp.eq.s32.totalorder %s37, 7
      %p279 = por %p277, %p278
      %p280 = scmp.ne.s32.totalorder %s269, %s270
      %p281 = scmp.eq.s32.totalorder %s37, 0
      %p282 = por %p280, %p281
      %p283 = scmp.ne.s32.totalorder %s269, %s270
      %p284 = scmp.eq.s32.totalorder %s38, 7
      %p285 = por %p283, %p284
      %p287 = scmp.ne.s32.totalorder %s270, %s286
      %p288 = scmp.eq.s32.totalorder %s38, 0
      %p289 = por %p287, %p288
      %s290 = ssub.s32 %s41, %s50
      %p291 = scmp.eq.s32.totalorder %s290, 0
      %s293 = sadd.s32 %s292, 1
      %s294 = scalar_select %p291, %s292, %s293
      %p297 = pneg %p291
      %p298 = scmp.eq.s32.totalorder %s32, 7
      %p299 = por %p297, %p298
      %p300 = scmp.ne.s32.totalorder %s292, %s295
      %p301 = scmp.eq.s32.totalorder %s32, 0
      %p302 = por %p300, %p301
      %p303 = scmp.ne.s32.totalorder %s292, %s295
      %p304 = scmp.eq.s32.totalorder %s37, 7
      %p305 = por %p303, %p304
      %p306 = scmp.ne.s32.totalorder %s295, %s296
      %p307 = scmp.eq.s32.totalorder %s37, 0
      %p308 = por %p306, %p307
      %p309 = scmp.ne.s32.totalorder %s295, %s296
      %p310 = scmp.eq.s32.totalorder %s38, 7
      %p311 = por %p309, %p310
      %p313 = scmp.ne.s32.totalorder %s296, %s312
      %p314 = scmp.eq.s32.totalorder %s38, 0
      %p315 = por %p313, %p314
      %s316 = ssub.s32 %s41, %s50
      %p317 = scmp.eq.s32.totalorder %s316, 0
      %s319 = sadd.s32 %s318, 1
      %s320 = scalar_select %p317, %s318, %s319
      %p323 = pneg %p317
      %p324 = scmp.eq.s32.totalorder %s32, 7
      %p325 = por %p323, %p324
      %p326 = scmp.ne.s32.totalorder %s318, %s321
      %p327 = scmp.eq.s32.totalorder %s32, 0
      %p328 = por %p326, %p327
      %p329 = scmp.ne.s32.totalorder %s318, %s321
      %p330 = scmp.eq.s32.totalorder %s37, 7
      %p331 = por %p329, %p330
      %p332 = scmp.ne.s32.totalorder %s321, %s322
      %p333 = scmp.eq.s32.totalorder %s37, 0
      %p334 = por %p332, %p333
      %p335 = scmp.ne.s32.totalorder %s321, %s322
      %p336 = scmp.eq.s32.totalorder %s38, 7
      %p337 = por %p335, %p336
      %p339 = scmp.ne.s32.totalorder %s322, %s338
      %p340 = scmp.eq.s32.totalorder %s38, 0
      %p341 = por %p339, %p340
      %s342 = ssub.s32 %s41, %s50
      %p343 = scmp.eq.s32.totalorder %s342, 0
      %s345 = sadd.s32 %s344, 1
      %s346 = scalar_select %p343, %s344, %s345
      %p349 = pneg %p343
      %p350 = scmp.eq.s32.totalorder %s32, 7
      %p351 = por %p349, %p350
      %p352 = scmp.ne.s32.totalorder %s344, %s347
      %p353 = scmp.eq.s32.totalorder %s32, 0
      %p354 = por %p352, %p353
      %p355 = scmp.ne.s32.totalorder %s344, %s347
      %p356 = scmp.eq.s32.totalorder %s37, 7
      %p357 = por %p355, %p356
      %p358 = scmp.ne.s32.totalorder %s347, %s348
      %p359 = scmp.eq.s32.totalorder %s37, 0
      %p360 = por %p358, %p359
      %p361 = scmp.ne.s32.totalorder %s347, %s348
      %p362 = scmp.eq.s32.totalorder %s38, 7
      %p363 = por %p361, %p362
      %p365 = scmp.ne.s32.totalorder %s348, %s364
      %p366 = scmp.eq.s32.totalorder %s38, 0
      %p367 = por %p365, %p366
      %s368 = ssub.s32 %s41, %s50
      %p369 = scmp.eq.s32.totalorder %s368, 0
      %s371 = sadd.s32 %s370, 1
      %s372 = scalar_select %p369, %s370, %s371
      %p375 = pneg %p369
      %p376 = scmp.eq.s32.totalorder %s32, 7
      %p377 = por %p375, %p376
      %p378 = scmp.ne.s32.totalorder %s370, %s373
      %p379 = scmp.eq.s32.totalorder %s32, 0
      %p380 = por %p378, %p379
      %p381 = scmp.ne.s32.totalorder %s370, %s373
      %p382 = scmp.eq.s32.totalorder %s37, 7
      %p383 = por %p381, %p382
      %p384 = scmp.ne.s32.totalorder %s373, %s374
      %p385 = scmp.eq.s32.totalorder %s37, 0
      %p386 = por %p384, %p385
      %p387 = scmp.ne.s32.totalorder %s373, %s374
      %p388 = scmp.eq.s32.totalorder %s38, 7
      %p389 = por %p387, %p388
      %p391 = scmp.ne.s32.totalorder %s374, %s390
      %p392 = scmp.eq.s32.totalorder %s38, 0
      %p393 = por %p391, %p392
      %s394 = ssub.s32 %s41, %s50
      %p395 = scmp.eq.s32.totalorder %s394, 0
      %s397 = sadd.s32 %s396, 1
      %s398 = scalar_select %p395, %s396, %s397
      %p401 = pneg %p395
      %p402 = scmp.eq.s32.totalorder %s32, 7
      %p403 = por %p401, %p402
      %p404 = scmp.ne.s32.totalorder %s396, %s399
      %p405 = scmp.eq.s32.totalorder %s32, 0
      %p406 = por %p404, %p405
      %p407 = scmp.ne.s32.totalorder %s396, %s399
      %p408 = scmp.eq.s32.totalorder %s37, 7
      %p409 = por %p407, %p408
      %p410 = scmp.ne.s32.totalorder %s399, %s400
      %p411 = scmp.eq.s32.totalorder %s37, 0
      %p412 = por %p410, %p411
      %p413 = scmp.ne.s32.totalorder %s399, %s400
      %p414 = scmp.eq.s32.totalorder %s38, 7
      %p415 = por %p413, %p414
      %p417 = scmp.ne.s32.totalorder %s400, %s416
      %p418 = scmp.eq.s32.totalorder %s38, 0
      %p419 = por %p417, %p418
      %s420 = ssub.s32 %s41, %s50
      %p421 = scmp.eq.s32.totalorder %s420, 0
      %s423 = sadd.s32 %s422, 1
      %s424 = scalar_select %p421, %s422, %s423
      %p427 = pneg %p421
      %p428 = scmp.eq.s32.totalorder %s32, 7
      %p429 = por %p427, %p428
      %p430 = scmp.ne.s32.totalorder %s422, %s425
      %p431 = scmp.eq.s32.totalorder %s32, 0
      %p432 = por %p430, %p431
      %p433 = scmp.ne.s32.totalorder %s422, %s425
      %p434 = scmp.eq.s32.totalorder %s37, 7
      %p435 = por %p433, %p434
      %p436 = scmp.ne.s32.totalorder %s425, %s426
      %p437 = scmp.eq.s32.totalorder %s37, 0
      %p438 = por %p436, %p437
      %p439 = scmp.ne.s32.totalorder %s425, %s426
      %p440 = scmp.eq.s32.totalorder %s38, 7
      %p441 = por %p439, %p440
      %p443 = scmp.ne.s32.totalorder %s426, %s442
      %p444 = scmp.eq.s32.totalorder %s38, 0
      %p445 = por %p443, %p444
      %s447 = sadd.s32 %s446, 1
      %p450 = scmp.eq.s32.totalorder %s32, 7
      %p451 = scmp.ne.s32.totalorder %s446, %s448
      %p452 = scmp.eq.s32.totalorder %s32, 0
      %p453 = por %p451, %p452
      %p454 = scmp.ne.s32.totalorder %s446, %s448
      %p455 = scmp.eq.s32.totalorder %s37, 7
      %p456 = por %p454, %p455
      %p457 = scmp.ne.s32.totalorder %s448, %s449
      %p458 = scmp.eq.s32.totalorder %s37, 0
      %p459 = por %p457, %p458
      %p460 = scmp.ne.s32.totalorder %s448, %s449
      %p461 = scmp.eq.s32.totalorder %s38, 7
      %p462 = por %p460, %p461
      %p464 = scmp.ne.s32.totalorder %s449, %s463
      %p465 = scmp.eq.s32.totalorder %s38, 0
      %p466 = por %p464, %p465
      %s467 = ssub.s32 %s39, %s58
      %s468 = ssub.s32 %s40, %s54
      %s469 = sor.u32 %s467, %s468
      %p470 = scmp.eq.s32.totalorder %s469, 0
      %s472 = sadd.s32 %s471, 1
      %s473 = scalar_select %p470, %s471, %s472
      %p476 = pneg %p470
      %p477 = scmp.eq.s32.totalorder %s32, 7
      %p478 = por %p476, %p477
      %p479 = scmp.ne.s32.totalorder %s471, %s474
      %p480 = scmp.eq.s32.totalorder %s32, 0
      %p481 = por %p479, %p480
      %p482 = scmp.ne.s32.totalorder %s471, %s474
      %p483 = scmp.eq.s32.totalorder %s37, 7
      %p484 = por %p482, %p483
      %p485 = scmp.ne.s32.totalorder %s474, %s475
      %p486 = scmp.eq.s32.totalorder %s37, 0
      %p487 = por %p485, %p486
      %p488 = scmp.ne.s32.totalorder %s474, %s475
      %p489 = scmp.eq.s32.totalorder %s38, 7
      %p490 = por %p488, %p489
      %p492 = scmp.ne.s32.totalorder %s475, %s491
      %p493 = scmp.eq.s32.totalorder %s38, 0
      %p494 = por %p492, %p493
      %p495 = scmp.le.s32.totalorder 1, %s32
      %p496 = scmp.lt.s32.totalorder %s32, 9
      %p497 = pnand %p495, %p496
      %p498 = pneg %p497
      // Predicated region
      $region9: #{tpu_custom_call.1} parent=5 // pred_check
        _
      $region10: #{tpu_custom_call.1} parent=5 // pred_check_branch
        %500 = sbr.rel (%p497) target = $region12
      $region11: #{tpu_custom_call.1} parent=5 // pred_region
        %s501 = ssub.s32 %s32, 1
        // Predicated region
        $region13: #{tpu_custom_call.1} parent=11 // pred_check
          %p502 = pneg %p152
        $region14: #{tpu_custom_call.1} parent=11 // pred_check_branch
          %504 = sbr.rel (%p502) target = $region16
        $region15: #{tpu_custom_call.1} parent=11 // pred_region
          %s506 = ssub.s32 512, 512
          %507 = vsyncadd [#allocation10], %s506
          %s508 = sshll.u32 [#allocation9], 4
          %s509 = int_to_ptr.vmem [resolvable:$true] %s508
          %514 = dma.hbm_to_vmem [thread:$0]  %s3, 512, %s509, [#allocation10], 256, 256, 16
        $region16: #{tpu_custom_call.1} parent=11 // pred_fallthru
          _
        // Predicated region
        $region17: #{tpu_custom_call.1} parent=11 // pred_check
          %p515 = pneg %p459
        $region18: #{tpu_custom_call.1} parent=11 // pred_check_branch
          %517 = sbr.rel (%p515) target = $region20
        $region19: #{tpu_custom_call.1} parent=11 // pred_region
          _
        $region20: #{tpu_custom_call.1} parent=11 // pred_fallthru
          _
      $region12: #{tpu_custom_call.1} parent=5 // pred_fallthru
        _
      %p518 = scmp.lt.s32.totalorder %s32, 8
      // Predicated region
      $region21: #{tpu_custom_call.1} parent=5 // pred_check
        %p519 = pneg %p518
      $region22: #{tpu_custom_call.1} parent=5 // pred_check_branch
        %521 = sbr.rel (%p519) target = $region24
      $region23: #{tpu_custom_call.1} parent=5 // pred_region
        // Predicated region
        $region25: #{tpu_custom_call.1} parent=23 // pred_check
          %p522 = pneg %p73
        $region26: #{tpu_custom_call.1} parent=23 // pred_check_branch
          %524 = sbr.rel (%p522) target = $region28
        $region27: #{tpu_custom_call.1} parent=23 // pred_region
          %s525 = sand.u32 %s32, 1
          %s526 = scalar_lea.sflag [#allocation4], %s525
          %s527 = sand.u32 %s63, 1
          %s528 = smul.addr %s527, 16
          %s529 = scalar_lea.vmem [#allocation3], %s528
          %s531 = ssub.s32 256, 256
          %532 = vsyncadd %s526, %s531
          %s533 = smul.addr %s40, 2
          %s534 = smul.addr %s39, 4
          %s535 = sadd.s32 %s533, %s534
          %s536 = smul.addr %s535, 128
          %s537 = scalar_lea.hbm %s0, %s536
          %s539 = sshll.u32 %s529, 4
          %s540 = int_to_ptr.vmem [resolvable:$true] %s539
          %542 = dma.hbm_to_vmem [thread:$0]  %s537, 256, %s540, %s526
        $region28: #{tpu_custom_call.1} parent=23 // pred_fallthru
          _
        // Predicated region
        $region29: #{tpu_custom_call.1} parent=23 // pred_check
          %p543 = pneg %p99
        $region30: #{tpu_custom_call.1} parent=23 // pred_check_branch
          %545 = sbr.rel (%p543) target = $region32
        $region31: #{tpu_custom_call.1} parent=23 // pred_region
          %s546 = sand.u32 %s32, 1
          %s547 = scalar_lea.sflag [#allocation7], %s546
          %s548 = sand.u32 %s89, 1
          %s549 = smul.addr %s548, 32
          %s550 = scalar_lea.vmem [#allocation6], %s549
          %s552 = ssub.s32 512, 512
          %553 = vsyncadd %s547, %s552
          %s554 = smul.addr %s39, 4
          %s555 = smul.addr %s554, 128
          %s556 = scalar_lea.hbm %s1, %s555
          %s557 = sshll.u32 %s550, 4
          %s558 = int_to_ptr.vmem [resolvable:$true] %s557
          %563 = dma.hbm_to_vmem [thread:$0]  %s556, 512, %s558, %s547, 256, 256, 16
        $region32: #{tpu_custom_call.1} parent=23 // pred_fallthru
          _
        // Predicated region
        $region33: #{tpu_custom_call.1} parent=23 // pred_check
          %p564 = pneg %p125
        $region34: #{tpu_custom_call.1} parent=23 // pred_check_branch
          %566 = sbr.rel (%p564) target = $region36
        $region35: #{tpu_custom_call.1} parent=23 // pred_region
          %s567 = sand.u32 %s32, 1
          %s568 = scalar_lea.sflag [#allocation7], %s567
          %s569 = sand.u32 %s115, 1
          %s570 = smul.addr %s569, 32
          %s571 = scalar_lea.vmem [#allocation8], %s570
          %s573 = ssub.s32 512, 512
          %574 = vsyncadd %s568, %s573
          %s575 = smul.addr %s39, 4
          %s576 = smul.addr %s575, 128
          %s577 = scalar_lea.hbm %s2, %s576
          %s578 = sshll.u32 %s571, 4
          %s579 = int_to_ptr.vmem [resolvable:$true] %s578
          %584 = dma.hbm_to_vmem [thread:$0]  %s577, 512, %s579, %s568, 256, 256, 16
        $region36: #{tpu_custom_call.1} parent=23 // pred_fallthru
          _
        // Predicated region
        $region37: #{tpu_custom_call.1} parent=23 // pred_check
          %p585 = pneg %p172
        $region38: #{tpu_custom_call.1} parent=23 // pred_check_branch
          %587 = sbr.rel (%p585) target = $region40
        $region39: #{tpu_custom_call.1} parent=23 // pred_region
          %p588 = scmp.lt.s32.totalorder %s39, 1
          %s589 = scalar_select %p588, %s39, 1
          %s590 = scalar_lea.vmem %s4, %s589
        $region40: #{tpu_custom_call.1} parent=23 // pred_fallthru
          _
        // Predicated region
        $region41: #{tpu_custom_call.1} parent=23 // pred_check
          %p591 = pneg %p198
        $region42: #{tpu_custom_call.1} parent=23 // pred_check_branch
          %593 = sbr.rel (%p591) target = $region44
        $region43: #{tpu_custom_call.1} parent=23 // pred_region
          %s594 = sand.u32 %s32, 1
          %s595 = scalar_lea.sflag [#allocation4], %s594
          %s596 = sand.u32 %s188, 1
          %s597 = smul.addr %s596, 256
          %s598 = scalar_lea.vmem [#allocation11], %s597
          %s600 = ssub.s32 4096, 4096
          %601 = vsyncadd %s595, %s600
          %s602 = smul.addr %s41, 128
          %s603 = scalar_lea.hbm %s5, %s602
          %s604 = sshll.u32 %s598, 4
          %s605 = int_to_ptr.vmem [resolvable:$true] %s604
          %610 = dma.hbm_to_vmem [thread:$0]  %s603, 4096, %s605, %s595, 256, 128, 8
        $region44: #{tpu_custom_call.1} parent=23 // pred_fallthru
          _
        // Predicated region
        $region45: #{tpu_custom_call.1} parent=23 // pred_check
          %p611 = pneg %p224
        $region46: #{tpu_custom_call.1} parent=23 // pred_check_branch
          %613 = sbr.rel (%p611) target = $region48
        $region47: #{tpu_custom_call.1} parent=23 // pred_region
          %p614 = scmp.lt.s32.totalorder %s41, 1
          %s615 = scalar_select %p614, %s41, 1
          %s616 = scalar_lea.vmem %s6, %s615
        $region48: #{tpu_custom_call.1} parent=23 // pred_fallthru
          _
        // Predicated region
        $region49: #{tpu_custom_call.1} parent=23 // pred_check
          %p617 = pneg %p250
        $region50: #{tpu_custom_call.1} parent=23 // pred_check_branch
          %619 = sbr.rel (%p617) target = $region52
        $region51: #{tpu_custom_call.1} parent=23 // pred_region
          %s620 = sand.u32 %s32, 1
          %s621 = scalar_lea.sflag [#allocation7], %s620
          %s622 = sand.u32 %s240, 1
          %s623 = smul.addr %s622, 256
          %s624 = scalar_lea.vmem [#allocation12], %s623
          %s626 = ssub.s32 4096, 4096
          %627 = vsyncadd %s621, %s626
          %s628 = smul.addr %s41, 128
          %s629 = scalar_lea.hbm %s7, %s628
          %s630 = sshll.u32 %s624, 4
          %s631 = int_to_ptr.vmem [resolvable:$true] %s630
          %636 = dma.hbm_to_vmem [thread:$0]  %s629, 4096, %s631, %s621, 256, 128, 8
        $region52: #{tpu_custom_call.1} parent=23 // pred_fallthru
          _
        // Predicated region
        $region53: #{tpu_custom_call.1} parent=23 // pred_check
          %p637 = pneg %p276
        $region54: #{tpu_custom_call.1} parent=23 // pred_check_branch
          %639 = sbr.rel (%p637) target = $region56
        $region55: #{tpu_custom_call.1} parent=23 // pred_region
          %p640 = scmp.lt.s32.totalorder %s41, 1
          %s641 = scalar_select %p640, %s41, 1
          %s642 = scalar_lea.vmem %s8, %s641
        $region56: #{tpu_custom_call.1} parent=23 // pred_fallthru
          _
        // Predicated region
        $region57: #{tpu_custom_call.1} parent=23 // pred_check
          %p643 = pneg %p302
        $region58: #{tpu_custom_call.1} parent=23 // pred_check_branch
          %645 = sbr.rel (%p643) target = $region60
        $region59: #{tpu_custom_call.1} parent=23 // pred_region
          %s646 = sand.u32 %s32, 1
          %s647 = scalar_lea.sflag [#allocation4], %s646
          %s648 = sand.u32 %s292, 1
          %s649 = smul.addr %s648, 256
          %s650 = scalar_lea.vmem [#allocation13], %s649
          %s652 = ssub.s32 4096, 4096
          %653 = vsyncadd %s647, %s652
          %s654 = smul.addr %s41, 128
          %s655 = scalar_lea.hbm %s9, %s654
          %s656 = sshll.u32 %s650, 4
          %s657 = int_to_ptr.vmem [resolvable:$true] %s656
          %662 = dma.hbm_to_vmem [thread:$0]  %s655, 4096, %s657, %s647, 256, 128, 8
        $region60: #{tpu_custom_call.1} parent=23 // pred_fallthru
          _
        // Predicated region
        $region61: #{tpu_custom_call.1} parent=23 // pred_check
          %p663 = pneg %p328
        $region62: #{tpu_custom_call.1} parent=23 // pred_check_branch
          %665 = sbr.rel (%p663) target = $region64
        $region63: #{tpu_custom_call.1} parent=23 // pred_region
          %p666 = scmp.lt.s32.totalorder %s41, 1
          %s667 = scalar_select %p666, %s41, 1
          %s668 = scalar_lea.vmem %s10, %s667
        $region64: #{tpu_custom_call.1} parent=23 // pred_fallthru
          _
        // Predicated region
        $region65: #{tpu_custom_call.1} parent=23 // pred_check
          %p669 = pneg %p354
        $region66: #{tpu_custom_call.1} parent=23 // pred_check_branch
          %671 = sbr.rel (%p669) target = $region68
        $region67: #{tpu_custom_call.1} parent=23 // pred_region
          %s672 = sand.u32 %s32, 1
          %s673 = scalar_lea.sflag [#allocation7], %s672
          %s674 = sand.u32 %s344, 1
          %s675 = smul.addr %s674, 256
          %s676 = scalar_lea.vmem [#allocation14], %s675
          %s678 = ssub.s32 4096, 4096
          %679 = vsyncadd %s673, %s678
          %s680 = smul.addr %s41, 128
          %s681 = scalar_lea.hbm %s11, %s680
          %s682 = sshll.u32 %s676, 4
          %s683 = int_to_ptr.vmem [resolvable:$true] %s682
          %688 = dma.hbm_to_vmem [thread:$0]  %s681, 4096, %s683, %s673, 256, 128, 8
        $region68: #{tpu_custom_call.1} parent=23 // pred_fallthru
          _
        // Predicated region
        $region69: #{tpu_custom_call.1} parent=23 // pred_check
          %p689 = pneg %p380
        $region70: #{tpu_custom_call.1} parent=23 // pred_check_branch
          %691 = sbr.rel (%p689) target = $region72
        $region71: #{tpu_custom_call.1} parent=23 // pred_region
          %p692 = scmp.lt.s32.totalorder %s41, 1
          %s693 = scalar_select %p692, %s41, 1
          %s694 = scalar_lea.vmem %s12, %s693
        $region72: #{tpu_custom_call.1} parent=23 // pred_fallthru
          _
        // Predicated region
        $region73: #{tpu_custom_call.1} parent=23 // pred_check
          %p695 = pneg %p406
        $region74: #{tpu_custom_call.1} parent=23 // pred_check_branch
          %697 = sbr.rel (%p695) target = $region76
        $region75: #{tpu_custom_call.1} parent=23 // pred_region
          %p698 = scmp.lt.s32.totalorder %s41, 1
          %s699 = scalar_select %p698, %s41, 1
          %s700 = scalar_lea.vmem %s13, %s699
        $region76: #{tpu_custom_call.1} parent=23 // pred_fallthru
          _
        // Predicated region
        $region77: #{tpu_custom_call.1} parent=23 // pred_check
          %p701 = pneg %p432
        $region78: #{tpu_custom_call.1} parent=23 // pred_check_branch
          %703 = sbr.rel (%p701) target = $region80
        $region79: #{tpu_custom_call.1} parent=23 // pred_region
          %s704 = sand.u32 %s32, 1
          %s705 = scalar_lea.sflag [#allocation4], %s704
          %s706 = sand.u32 %s422, 1
          %s707 = smul.addr %s706, 256
          %s708 = scalar_lea.vmem [#allocation15], %s707
          %s709 = smul.u32 16, %s41
          %s711 = ssub.s32 4096, 4096
          %712 = vsyncadd %s705, %s711
          %s713 = smul.addr %s709, 2
          %s714 = smul.addr %s713, 128
          %s715 = scalar_lea.hbm %s14, %s714
          %s716 = sshll.u32 %s708, 4
          %s717 = int_to_ptr.vmem [resolvable:$true] %s716
          %722 = dma.hbm_to_vmem [thread:$0]  %s715, 4096, %s717, %s705, 256, 256, 16
        $region80: #{tpu_custom_call.1} parent=23 // pred_fallthru
          _
      $region24: #{tpu_custom_call.1} parent=5 // pred_fallthru
        _
      %p723 = scmp.le.s32.totalorder 1, %s32
      %p724 = scmp.lt.s32.totalorder %s32, 9
      %p725 = pnand %p723, %p724
      %p726 = pneg %p725
      // Predicated region
      $region81: #{tpu_custom_call.1} parent=5 // pred_check
        _
      $region82: #{tpu_custom_call.1} parent=5 // pred_check_branch
        %728 = sbr.rel (%p725) target = $region84
      $region83: #{tpu_custom_call.1} parent=5 // pred_region
        %s729 = ssub.s32 %s32, 1
        %s730 = sand.u32 %s37, 1
        %s731 = scalar_lea.sflag [#allocation4], %s730
        %s732 = sand.u32 %s66, 1
        %s733 = smul.addr %s732, 16
        %s734 = scalar_lea.vmem [#allocation3], %s733
        // Predicated region
        $region85: #{tpu_custom_call.1} parent=83 // pred_check
          %p735 = pneg %p79
        $region86: #{tpu_custom_call.1} parent=83 // pred_check_branch
          %737 = sbr.rel (%p735) target = $region88
        $region87: #{tpu_custom_call.1} parent=83 // pred_region
          %738 = dma.done %s731, 256
        $region88: #{tpu_custom_call.1} parent=83 // pred_fallthru
          _
        %s739 = sand.u32 %s37, 1
        %s740 = scalar_lea.sflag [#allocation7], %s739
        %s741 = sand.u32 %s92, 1
        %s742 = smul.addr %s741, 32
        %s743 = scalar_lea.vmem [#allocation6], %s742
        // Predicated region
        $region89: #{tpu_custom_call.1} parent=83 // pred_check
          %p744 = pneg %p105
        $region90: #{tpu_custom_call.1} parent=83 // pred_check_branch
          %746 = sbr.rel (%p744) target = $region92
        $region91: #{tpu_custom_call.1} parent=83 // pred_region
          %747 = dma.done %s740, 512
        $region92: #{tpu_custom_call.1} parent=83 // pred_fallthru
          _
        %s748 = sand.u32 %s37, 1
        %s749 = scalar_lea.sflag [#allocation7], %s748
        %s750 = sand.u32 %s118, 1
        %s751 = smul.addr %s750, 32
        %s752 = scalar_lea.vmem [#allocation8], %s751
        // Predicated region
        $region93: #{tpu_custom_call.1} parent=83 // pred_check
          %p753 = pneg %p131
        $region94: #{tpu_custom_call.1} parent=83 // pred_check_branch
          %755 = sbr.rel (%p753) target = $region96
        $region95: #{tpu_custom_call.1} parent=83 // pred_region
          %756 = dma.done %s749, 512
        $region96: #{tpu_custom_call.1} parent=83 // pred_fallthru
          _
        // Predicated region
        $region97: #{tpu_custom_call.1} parent=83 // pred_check
          %p757 = pneg %p152
        $region98: #{tpu_custom_call.1} parent=83 // pred_check_branch
          %759 = sbr.rel (%p757) target = $region100
        $region99: #{tpu_custom_call.1} parent=83 // pred_region
          %760 = dma.done [#allocation10], 512
        $region100: #{tpu_custom_call.1} parent=83 // pred_fallthru
          _
        %s761 = sand.u32 %s37, 1
        %s762 = scalar_lea.sflag [#allocation4], %s761
        %s763 = sand.u32 %s191, 1
        %s764 = smul.addr %s763, 256
        %s765 = scalar_lea.vmem [#allocation11], %s764
        // Predicated region
        $region101: #{tpu_custom_call.1} parent=83 // pred_check
          %p766 = pneg %p204
        $region102: #{tpu_custom_call.1} parent=83 // pred_check_branch
          %768 = sbr.rel (%p766) target = $region104
        $region103: #{tpu_custom_call.1} parent=83 // pred_region
          %769 = dma.done %s762, 4096
        $region104: #{tpu_custom_call.1} parent=83 // pred_fallthru
          _
        %s770 = sand.u32 %s37, 1
        %s771 = scalar_lea.sflag [#allocation7], %s770
        %s772 = sand.u32 %s243, 1
        %s773 = smul.addr %s772, 256
        %s774 = scalar_lea.vmem [#allocation12], %s773
        // Predicated region
        $region105: #{tpu_custom_call.1} parent=83 // pred_check
          %p775 = pneg %p256
        $region106: #{tpu_custom_call.1} parent=83 // pred_check_branch
          %777 = sbr.rel (%p775) target = $region108
        $region107: #{tpu_custom_call.1} parent=83 // pred_region
          %778 = dma.done %s771, 4096
        $region108: #{tpu_custom_call.1} parent=83 // pred_fallthru
          _
        %s779 = sand.u32 %s37, 1
        %s780 = scalar_lea.sflag [#allocation4], %s779
        %s781 = sand.u32 %s295, 1
        %s782 = smul.addr %s781, 256
        %s783 = scalar_lea.vmem [#allocation13], %s782
        // Predicated region
        $region109: #{tpu_custom_call.1} parent=83 // pred_check
          %p784 = pneg %p308
        $region110: #{tpu_custom_call.1} parent=83 // pred_check_branch
          %786 = sbr.rel (%p784) target = $region112
        $region111: #{tpu_custom_call.1} parent=83 // pred_region
          %787 = dma.done %s780, 4096
        $region112: #{tpu_custom_call.1} parent=83 // pred_fallthru
          _
        %s788 = sand.u32 %s37, 1
        %s789 = scalar_lea.sflag [#allocation7], %s788
        %s790 = sand.u32 %s347, 1
        %s791 = smul.addr %s790, 256
        %s792 = scalar_lea.vmem [#allocation14], %s791
        // Predicated region
        $region113: #{tpu_custom_call.1} parent=83 // pred_check
          %p793 = pneg %p360
        $region114: #{tpu_custom_call.1} parent=83 // pred_check_branch
          %795 = sbr.rel (%p793) target = $region116
        $region115: #{tpu_custom_call.1} parent=83 // pred_region
          %796 = dma.done %s789, 4096
        $region116: #{tpu_custom_call.1} parent=83 // pred_fallthru
          _
        %s797 = sand.u32 %s37, 1
        %s798 = scalar_lea.sflag [#allocation4], %s797
        %s799 = sand.u32 %s425, 1
        %s800 = smul.addr %s799, 256
        %s801 = scalar_lea.vmem [#allocation15], %s800
        // Predicated region
        $region117: #{tpu_custom_call.1} parent=83 // pred_check
          %p802 = pneg %p438
        $region118: #{tpu_custom_call.1} parent=83 // pred_check_branch
          %804 = sbr.rel (%p802) target = $region120
        $region119: #{tpu_custom_call.1} parent=83 // pred_region
          %805 = dma.done %s798, 4096
        $region120: #{tpu_custom_call.1} parent=83 // pred_fallthru
          _
        %s806 = sand.u32 %s37, 1
        %s807 = scalar_lea.sflag [#allocation4], %s806
        %s808 = sand.u32 %s66, 1
        %s809 = smul.addr %s808, 16
        %s810 = scalar_lea.vmem [#allocation3], %s809
        %p811 = pneg %p79
        %p812 = pneg %p76
        %s813 = sand.u32 %s37, 1
        %s814 = scalar_lea.sflag [#allocation7], %s813
        %s815 = sand.u32 %s92, 1
        %s816 = smul.addr %s815, 32
        %s817 = scalar_lea.vmem [#allocation6], %s816
        %p818 = pneg %p105
        %p819 = pneg %p102
        %s820 = sand.u32 %s37, 1
        %s821 = scalar_lea.sflag [#allocation7], %s820
        %s822 = sand.u32 %s118, 1
        %s823 = smul.addr %s822, 32
        %s824 = scalar_lea.vmem [#allocation8], %s823
        %p825 = pneg %p131
        %p826 = pneg %p128
        %p827 = pneg %p152
        %p828 = pneg %p149
        %p829 = scmp.lt.s32.totalorder %s42, 1
        %s830 = scalar_select %p829, %s42, 1
        %s831 = scalar_lea.vmem %s4, %s830
        %p832 = pneg %p178
        %p833 = pneg %p175
        %s834 = sand.u32 %s37, 1
        %s835 = scalar_lea.sflag [#allocation4], %s834
        %s836 = sand.u32 %s191, 1
        %s837 = smul.addr %s836, 256
        %s838 = scalar_lea.vmem [#allocation11], %s837
        %p839 = pneg %p204
        %p840 = pneg %p201
        %p841 = scmp.lt.s32.totalorder %s44, 1
        %s842 = scalar_select %p841, %s44, 1
        %s843 = scalar_lea.vmem %s6, %s842
        %p844 = pneg %p230
        %p845 = pneg %p227
        %s846 = sand.u32 %s37, 1
        %s847 = scalar_lea.sflag [#allocation7], %s846
        %s848 = sand.u32 %s243, 1
        %s849 = smul.addr %s848, 256
        %s850 = scalar_lea.vmem [#allocation12], %s849
        %p851 = pneg %p256
        %p852 = pneg %p253
        %p853 = scmp.lt.s32.totalorder %s44, 1
        %s854 = scalar_select %p853, %s44, 1
        %s855 = scalar_lea.vmem %s8, %s854
        %p856 = pneg %p282
        %p857 = pneg %p279
        %s858 = sand.u32 %s37, 1
        %s859 = scalar_lea.sflag [#allocation4], %s858
        %s860 = sand.u32 %s295, 1
        %s861 = smul.addr %s860, 256
        %s862 = scalar_lea.vmem [#allocation13], %s861
        %p863 = pneg %p308
        %p864 = pneg %p305
        %p865 = scmp.lt.s32.totalorder %s44, 1
        %s866 = scalar_select %p865, %s44, 1
        %s867 = scalar_lea.vmem %s10, %s866
        %p868 = pneg %p334
        %p869 = pneg %p331
        %s870 = sand.u32 %s37, 1
        %s871 = scalar_lea.sflag [#allocation7], %s870
        %s872 = sand.u32 %s347, 1
        %s873 = smul.addr %s872, 256
        %s874 = scalar_lea.vmem [#allocation14], %s873
        %p875 = pneg %p360
        %p876 = pneg %p357
        %p877 = scmp.lt.s32.totalorder %s44, 1
        %s878 = scalar_select %p877, %s44, 1
        %s879 = scalar_lea.vmem %s12, %s878
        %p880 = pneg %p386
        %p881 = pneg %p383
        %p882 = scmp.lt.s32.totalorder %s44, 1
        %s883 = scalar_select %p882, %s44, 1
        %s884 = scalar_lea.vmem %s13, %s883
        %p885 = pneg %p412
        %p886 = pneg %p409
        %s887 = sand.u32 %s37, 1
        %s888 = scalar_lea.sflag [#allocation4], %s887
        %s889 = sand.u32 %s425, 1
        %s890 = smul.addr %s889, 256
        %s891 = scalar_lea.vmem [#allocation15], %s890
        %p892 = pneg %p438
        %p893 = pneg %p435
        %p894 = pneg %p459
        %p895 = pneg %p456
        %p896 = pneg %p487
        %p897 = pneg %p484
        %s898 = sand.u32 %s474, 1
        %s899 = scalar_lea.sflag [#allocation5], %s898
        %s900 = sand.u32 %s474, 1
        %s901 = smul.addr %s900, 16
        %s902 = scalar_lea.vmem [#allocation16], %s901
        %p903 = scmp.lt.s32.totalorder %s42, 1
        %s904 = scalar_select %p903, %s42, 1
        %s905 = scalar_lea.vmem %s4, %s904
        %p906 = scmp.lt.s32.totalorder %s44, 1
        %s907 = scalar_select %p906, %s44, 1
        %s908 = scalar_lea.vmem %s6, %s907
        %p909 = scmp.lt.s32.totalorder %s44, 1
        %s910 = scalar_select %p909, %s44, 1
        %s911 = scalar_lea.vmem %s8, %s910
        %p912 = scmp.lt.s32.totalorder %s44, 1
        %s913 = scalar_select %p912, %s44, 1
        %s914 = scalar_lea.vmem %s10, %s913
        %p915 = scmp.lt.s32.totalorder %s44, 1
        %s916 = scalar_select %p915, %s44, 1
        %s917 = scalar_lea.vmem %s12, %s916
        %p918 = scmp.lt.s32.totalorder %s44, 1
        %s919 = scalar_select %p918, %s44, 1
        %s920 = scalar_lea.vmem %s13, %s919
        %s921 = smul.u32 16, %s44
        %p922 = scmp.eq.s32.totalorder %s44, 0
        // Predicated region
        $region121: #{tpu_custom_call.1} parent=83 // pred_check
          %p923 = pneg %p922
        $region122: #{tpu_custom_call.1} parent=83 // pred_check_branch
          %925 = sbr.rel (%p923) target = $region124
        $region123: #{tpu_custom_call.1} parent=83 // pred_region
          %926 = vst [vmem:[#allocation2] sm:$0xff] 0.0
          %927 = vst [vmem:[#allocation2 + $0x8] sm:$0xff] 0.0
        $region124: #{tpu_custom_call.1} parent=83 // pred_fallthru
          _
        %v928 = vld [vmem:[%s734] sm:$0xff]
        %v929 = vld [vmem:[%s734 + $0x8] sm:$0xff]
        %v930 = vld [vmem:[%s765] sm:$0xff]
        %v931 = vld [vmem:[%s765 + $0x8] sm:$0xff]
        %v932 = vld [vmem:[%s765 + $0x10] sm:$0xff]
        %v933 = vld [vmem:[%s765 + $0x18] sm:$0xff]
        %v934 = vld [vmem:[%s765 + $0x20] sm:$0xff]
        %v935 = vld [vmem:[%s765 + $0x28] sm:$0xff]
        %v936 = vld [vmem:[%s765 + $0x30] sm:$0xff]
        %v937 = vld [vmem:[%s765 + $0x38] sm:$0xff]
        %v938 = vld [vmem:[%s765 + $0x40] sm:$0xff]
        %v939 = vld [vmem:[%s765 + $0x48] sm:$0xff]
        %v940 = vld [vmem:[%s765 + $0x50] sm:$0xff]
        %v941 = vld [vmem:[%s765 + $0x58] sm:$0xff]
        %v942 = vld [vmem:[%s765 + $0x60] sm:$0xff]
        %v943 = vld [vmem:[%s765 + $0x68] sm:$0xff]
        %v944 = vld [vmem:[%s765 + $0x70] sm:$0xff]
        %v945 = vld [vmem:[%s765 + $0x78] sm:$0xff]
        %v946 = vld [vmem:[%s765 + $0x80] sm:$0xff]
        %v947 = vld [vmem:[%s765 + $0x88] sm:$0xff]
        %v948 = vld [vmem:[%s765 + $0x90] sm:$0xff]
        %v949 = vld [vmem:[%s765 + $0x98] sm:$0xff]
        %v950 = vld [vmem:[%s765 + $0xa0] sm:$0xff]
        %v951 = vld [vmem:[%s765 + $0xa8] sm:$0xff]
        %v952 = vld [vmem:[%s765 + $0xb0] sm:$0xff]
        %v953 = vld [vmem:[%s765 + $0xb8] sm:$0xff]
        %v954 = vld [vmem:[%s765 + $0xc0] sm:$0xff]
        %v955 = vld [vmem:[%s765 + $0xc8] sm:$0xff]
        %v956 = vld [vmem:[%s765 + $0xd0] sm:$0xff]
        %v957 = vld [vmem:[%s765 + $0xd8] sm:$0xff]
        %v958 = vld [vmem:[%s765 + $0xe0] sm:$0xff]
        %v959 = vld [vmem:[%s765 + $0xe8] sm:$0xff]
        %v960 = vld [vmem:[%s765 + $0xf0] sm:$0xff]
        %v961 = vld [vmem:[%s765 + $0xf8] sm:$0xff]
        %v962 = vld [vmem:[%s908] sm:$0x1]
        %v964 = vlaneseq
        %v965 = vshrl.u32 %v964, 7
        %v966 = vsub.s32 0, %v965
        %v967 = vrot.slane %v962, %v966
        %969 = vmatprep.subr.mxu0 0.0
        %970 = vmatpush1.msra.mxu0 %v930
        %971 = vmatprep.subr.mxu0 0.0
        %972 = vmatpush1.msra.mxu0 %v931
        %973 = vmatprep.subr.mxu0 0.0
        %974 = vmatpush1.msra.mxu0 %v932
        %975 = vmatprep.subr.mxu0 0.0
        %976 = vmatpush1.msra.mxu0 %v933
        %977 = vmatprep.subr.mxu0 0.0
        %978 = vmatpush1.msra.mxu0 %v934
        %979 = vmatprep.subr.mxu0 0.0
        %980 = vmatpush1.msra.mxu0 %v935
        %981 = vmatprep.subr.mxu0 0.0
        %982 = vmatpush1.msra.mxu0 %v936
        %983 = vmatprep.subr.mxu0 0.0
        %984 = vmatpush1.msra.mxu0 %v937
        %985 = vmatprep.subr.mxu0 0.0
        %986 = vmatpush1.msra.mxu0 %v938
        %987 = vmatprep.subr.mxu0 0.0
        %988 = vmatpush1.msra.mxu0 %v939
        %989 = vmatprep.subr.mxu0 0.0
        %990 = vmatpush1.msra.mxu0 %v940
        %991 = vmatprep.subr.mxu0 0.0
        %992 = vmatpush1.msra.mxu0 %v941
        %993 = vmatprep.subr.mxu0 0.0
        %994 = vmatpush1.msra.mxu0 %v942
        %995 = vmatprep.subr.mxu0 0.0
        %996 = vmatpush1.msra.mxu0 %v943
        %997 = vmatprep.subr.mxu0 0.0
        %998 = vmatpush1.msra.mxu0 %v944
        %999 = vmatprep.subr.mxu0 0.0
        %1000 = vmatpush1.msra.mxu0 %v945
        %1001 = vmatprep.subr.mxu0 0.0
        %1002 = vmatpush1.msra.mxu0 %v946
        %1003 = vmatprep.subr.mxu0 0.0
        %1004 = vmatpush1.msra.mxu0 %v947
        %1005 = vmatprep.subr.mxu0 0.0
        %1006 = vmatpush1.msra.mxu0 %v948
        %1007 = vmatprep.subr.mxu0 0.0
        %1008 = vmatpush1.msra.mxu0 %v949
        %1009 = vmatprep.subr.mxu0 0.0
        %1010 = vmatpush1.msra.mxu0 %v950
        %1011 = vmatprep.subr.mxu0 0.0
        %1012 = vmatpush1.msra.mxu0 %v951
        %1013 = vmatprep.subr.mxu0 0.0
        %1014 = vmatpush1.msra.mxu0 %v952
        %1015 = vmatprep.subr.mxu0 0.0
        %1016 = vmatpush1.msra.mxu0 %v953
        %1017 = vmatprep.subr.mxu0 0.0
        %1018 = vmatpush1.msra.mxu0 %v954
        %1019 = vmatprep.subr.mxu0 0.0
        %1020 = vmatpush1.msra.mxu0 %v955
        %1021 = vmatprep.subr.mxu0 0.0
        %1022 = vmatpush1.msra.mxu0 %v956
        %1023 = vmatprep.subr.mxu0 0.0
        %1024 = vmatpush1.msra.mxu0 %v957
        %1025 = vmatprep.subr.mxu0 0.0
        %1026 = vmatpush1.msra.mxu0 %v958
        %1027 = vmatprep.subr.mxu0 0.0
        %1028 = vmatpush1.msra.mxu0 %v959
        %1029 = vmatprep.subr.mxu0 0.0
        %1030 = vmatpush1.msra.mxu0 %v960
        %1031 = vmatprep.subr.mxu0 0.0
        %1032 = vmatpush1.msra.mxu0 %v961
        %1033 = vmatprep.mubr.f32.mxu0 %v929
        %1034 = vmatmul.mubr.f32.gmra.mrb[0].mxu0 %v928
        %v1035 = vpop.f32.mrb[0].mxu0
        %v1036 = vadd.f32 %v967, %v1035
        %v1037 = vpop.f32.mrb[0].mxu0
        %1038 = vdwg.mxu0
        %v1039 = vld [vmem:[%s743] sm:$0xff]
        %v1040 = vld [vmem:[%s743 + $0x8] sm:$0xff]
        %v1041 = vld [vmem:[%s743 + $0x10] sm:$0xff]
        %v1042 = vld [vmem:[%s743 + $0x18] sm:$0xff]
        %v1043 = vld [vmem:[%s774] sm:$0xff]
        %v1044 = vld [vmem:[%s774 + $0x8] sm:$0xff]
        %v1045 = vld [vmem:[%s774 + $0x10] sm:$0xff]
        %v1046 = vld [vmem:[%s774 + $0x18] sm:$0xff]
        %v1047 = vld [vmem:[%s774 + $0x20] sm:$0xff]
        %v1048 = vld [vmem:[%s774 + $0x28] sm:$0xff]
        %v1049 = vld [vmem:[%s774 + $0x30] sm:$0xff]
        %v1050 = vld [vmem:[%s774 + $0x38] sm:$0xff]
        %v1051 = vld [vmem:[%s774 + $0x40] sm:$0xff]
        %v1052 = vld [vmem:[%s774 + $0x48] sm:$0xff]
        %v1053 = vld [vmem:[%s774 + $0x50] sm:$0xff]
        %v1054 = vld [vmem:[%s774 + $0x58] sm:$0xff]
        %v1055 = vld [vmem:[%s774 + $0x60] sm:$0xff]
        %v1056 = vld [vmem:[%s774 + $0x68] sm:$0xff]
        %v1057 = vld [vmem:[%s774 + $0x70] sm:$0xff]
        %v1058 = vld [vmem:[%s774 + $0x78] sm:$0xff]
        %v1059 = vld [vmem:[%s774 + $0x80] sm:$0xff]
        %v1060 = vld [vmem:[%s774 + $0x88] sm:$0xff]
        %v1061 = vld [vmem:[%s774 + $0x90] sm:$0xff]
        %v1062 = vld [vmem:[%s774 + $0x98] sm:$0xff]
        %v1063 = vld [vmem:[%s774 + $0xa0] sm:$0xff]
        %v1064 = vld [vmem:[%s774 + $0xa8] sm:$0xff]
        %v1065 = vld [vmem:[%s774 + $0xb0] sm:$0xff]
        %v1066 = vld [vmem:[%s774 + $0xb8] sm:$0xff]
        %v1067 = vld [vmem:[%s774 + $0xc0] sm:$0xff]
        %v1068 = vld [vmem:[%s774 + $0xc8] sm:$0xff]
        %v1069 = vld [vmem:[%s774 + $0xd0] sm:$0xff]
        %v1070 = vld [vmem:[%s774 + $0xd8] sm:$0xff]
        %v1071 = vld [vmem:[%s774 + $0xe0] sm:$0xff]
        %v1072 = vld [vmem:[%s774 + $0xe8] sm:$0xff]
        %v1073 = vld [vmem:[%s774 + $0xf0] sm:$0xff]
        %v1074 = vld [vmem:[%s774 + $0xf8] sm:$0xff]
        %v1075 = vld [vmem:[%s911] sm:$0x1]
        %v1077 = vlaneseq
        %v1078 = vshrl.u32 %v1077, 7
        %v1079 = vsub.s32 0, %v1078
        %v1080 = vrot.slane %v1075, %v1079
        %1082 = vmatprep.subr.mxu0 0.0
        %1083 = vmatpush1.msra.mxu0 %v1043
        %1084 = vmatprep.subr.mxu0 0.0
        %1085 = vmatpush1.msra.mxu0 %v1044
        %1086 = vmatprep.subr.mxu0 0.0
        %1087 = vmatpush1.msra.mxu0 %v1045
        %1088 = vmatprep.subr.mxu0 0.0
        %1089 = vmatpush1.msra.mxu0 %v1046
        %1090 = vmatprep.subr.mxu0 0.0
        %1091 = vmatpush1.msra.mxu0 %v1047
        %1092 = vmatprep.subr.mxu0 0.0
        %1093 = vmatpush1.msra.mxu0 %v1048
        %1094 = vmatprep.subr.mxu0 0.0
        %1095 = vmatpush1.msra.mxu0 %v1049
        %1096 = vmatprep.subr.mxu0 0.0
        %1097 = vmatpush1.msra.mxu0 %v1050
        %1098 = vmatprep.subr.mxu0 0.0
        %1099 = vmatpush1.msra.mxu0 %v1051
        %1100 = vmatprep.subr.mxu0 0.0
        %1101 = vmatpush1.msra.mxu0 %v1052
        %1102 = vmatprep.subr.mxu0 0.0
        %1103 = vmatpush1.msra.mxu0 %v1053
        %1104 = vmatprep.subr.mxu0 0.0
        %1105 = vmatpush1.msra.mxu0 %v1054
        %1106 = vmatprep.subr.mxu0 0.0
        %1107 = vmatpush1.msra.mxu0 %v1055
        %1108 = vmatprep.subr.mxu0 0.0
        %1109 = vmatpush1.msra.mxu0 %v1056
        %1110 = vmatprep.subr.mxu0 0.0
        %1111 = vmatpush1.msra.mxu0 %v1057
        %1112 = vmatprep.subr.mxu0 0.0
        %1113 = vmatpush1.msra.mxu0 %v1058
        %1114 = vmatprep.subr.mxu0 0.0
        %1115 = vmatpush1.msra.mxu0 %v1059
        %1116 = vmatprep.subr.mxu0 0.0
        %1117 = vmatpush1.msra.mxu0 %v1060
        %1118 = vmatprep.subr.mxu0 0.0
        %1119 = vmatpush1.msra.mxu0 %v1061
        %1120 = vmatprep.subr.mxu0 0.0
        %1121 = vmatpush1.msra.mxu0 %v1062
        %1122 = vmatprep.subr.mxu0 0.0
        %1123 = vmatpush1.msra.mxu0 %v1063
        %1124 = vmatprep.subr.mxu0 0.0
        %1125 = vmatpush1.msra.mxu0 %v1064
        %1126 = vmatprep.subr.mxu0 0.0
        %1127 = vmatpush1.msra.mxu0 %v1065
        %1128 = vmatprep.subr.mxu0 0.0
        %1129 = vmatpush1.msra.mxu0 %v1066
        %1130 = vmatprep.subr.mxu0 0.0
        %1131 = vmatpush1.msra.mxu0 %v1067
        %1132 = vmatprep.subr.mxu0 0.0
        %1133 = vmatpush1.msra.mxu0 %v1068
        %1134 = vmatprep.subr.mxu0 0.0
        %1135 = vmatpush1.msra.mxu0 %v1069
        %1136 = vmatprep.subr.mxu0 0.0
        %1137 = vmatpush1.msra.mxu0 %v1070
        %1138 = vmatprep.subr.mxu0 0.0
        %1139 = vmatpush1.msra.mxu0 %v1071
        %1140 = vmatprep.subr.mxu0 0.0
        %1141 = vmatpush1.msra.mxu0 %v1072
        %1142 = vmatprep.subr.mxu0 0.0
        %1143 = vmatpush1.msra.mxu0 %v1073
        %1144 = vmatprep.subr.mxu0 0.0
        %1145 = vmatpush1.msra.mxu0 %v1074
        %1146 = vmatprep.mubr.f32.mxu0 %v1040
        %1147 = vmatmul.mubr.f32.gmra.mrb[0].mxu0 %v1039
        %v1148 = vpop.f32.mrb[0].mxu0
        %v1149 = vadd.f32 %v1080, %v1148
        %v1150 = vpop.f32.mrb[0].mxu0
        %1151 = vmatprep.mubr.f32.mxu0 %v1042
        %1152 = vmatmul.mubr.f32.gmra.mrb[0].mxu0 %v1041
        %v1153 = vpop.f32.mrb[0].mxu0
        %v1154 = vadd.f32 %v1080, %v1153
        %v1155 = vpop.f32.mrb[0].mxu0
        %1156 = vdwg.mxu0
        %v1157 = vld [vmem:[%s752] sm:$0xff]
        %v1158 = vld [vmem:[%s752 + $0x8] sm:$0xff]
        %v1159 = vld [vmem:[%s752 + $0x10] sm:$0xff]
        %v1160 = vld [vmem:[%s752 + $0x18] sm:$0xff]
        %v1161 = vld [vmem:[%s783] sm:$0xff]
        %v1162 = vld [vmem:[%s783 + $0x8] sm:$0xff]
        %v1163 = vld [vmem:[%s783 + $0x10] sm:$0xff]
        %v1164 = vld [vmem:[%s783 + $0x18] sm:$0xff]
        %v1165 = vld [vmem:[%s783 + $0x20] sm:$0xff]
        %v1166 = vld [vmem:[%s783 + $0x28] sm:$0xff]
        %v1167 = vld [vmem:[%s783 + $0x30] sm:$0xff]
        %v1168 = vld [vmem:[%s783 + $0x38] sm:$0xff]
        %v1169 = vld [vmem:[%s783 + $0x40] sm:$0xff]
        %v1170 = vld [vmem:[%s783 + $0x48] sm:$0xff]
        %v1171 = vld [vmem:[%s783 + $0x50] sm:$0xff]
        %v1172 = vld [vmem:[%s783 + $0x58] sm:$0xff]
        %v1173 = vld [vmem:[%s783 + $0x60] sm:$0xff]
        %v1174 = vld [vmem:[%s783 + $0x68] sm:$0xff]
        %v1175 = vld [vmem:[%s783 + $0x70] sm:$0xff]
        %v1176 = vld [vmem:[%s783 + $0x78] sm:$0xff]
        %v1177 = vld [vmem:[%s783 + $0x80] sm:$0xff]
        %v1178 = vld [vmem:[%s783 + $0x88] sm:$0xff]
        %v1179 = vld [vmem:[%s783 + $0x90] sm:$0xff]
        %v1180 = vld [vmem:[%s783 + $0x98] sm:$0xff]
        %v1181 = vld [vmem:[%s783 + $0xa0] sm:$0xff]
        %v1182 = vld [vmem:[%s783 + $0xa8] sm:$0xff]
        %v1183 = vld [vmem:[%s783 + $0xb0] sm:$0xff]
        %v1184 = vld [vmem:[%s783 + $0xb8] sm:$0xff]
        %v1185 = vld [vmem:[%s783 + $0xc0] sm:$0xff]
        %v1186 = vld [vmem:[%s783 + $0xc8] sm:$0xff]
        %v1187 = vld [vmem:[%s783 + $0xd0] sm:$0xff]
        %v1188 = vld [vmem:[%s783 + $0xd8] sm:$0xff]
        %v1189 = vld [vmem:[%s783 + $0xe0] sm:$0xff]
        %v1190 = vld [vmem:[%s783 + $0xe8] sm:$0xff]
        %v1191 = vld [vmem:[%s783 + $0xf0] sm:$0xff]
        %v1192 = vld [vmem:[%s783 + $0xf8] sm:$0xff]
        %v1193 = vld [vmem:[%s914] sm:$0x1]
        %v1195 = vlaneseq
        %v1196 = vshrl.u32 %v1195, 7
        %v1197 = vsub.s32 0, %v1196
        %v1198 = vrot.slane %v1193, %v1197
        %1200 = vmatprep.subr.mxu0 0.0
        %1201 = vmatpush1.msra.mxu0 %v1161
        %1202 = vmatprep.subr.mxu0 0.0
        %1203 = vmatpush1.msra.mxu0 %v1162
        %1204 = vmatprep.subr.mxu0 0.0
        %1205 = vmatpush1.msra.mxu0 %v1163
        %1206 = vmatprep.subr.mxu0 0.0
        %1207 = vmatpush1.msra.mxu0 %v1164
        %1208 = vmatprep.subr.mxu0 0.0
        %1209 = vmatpush1.msra.mxu0 %v1165
        %1210 = vmatprep.subr.mxu0 0.0
        %1211 = vmatpush1.msra.mxu0 %v1166
        %1212 = vmatprep.subr.mxu0 0.0
        %1213 = vmatpush1.msra.mxu0 %v1167
        %1214 = vmatprep.subr.mxu0 0.0
        %1215 = vmatpush1.msra.mxu0 %v1168
        %1216 = vmatprep.subr.mxu0 0.0
        %1217 = vmatpush1.msra.mxu0 %v1169
        %1218 = vmatprep.subr.mxu0 0.0
        %1219 = vmatpush1.msra.mxu0 %v1170
        %1220 = vmatprep.subr.mxu0 0.0
        %1221 = vmatpush1.msra.mxu0 %v1171
        %1222 = vmatprep.subr.mxu0 0.0
        %1223 = vmatpush1.msra.mxu0 %v1172
        %1224 = vmatprep.subr.mxu0 0.0
        %1225 = vmatpush1.msra.mxu0 %v1173
        %1226 = vmatprep.subr.mxu0 0.0
        %1227 = vmatpush1.msra.mxu0 %v1174
        %1228 = vmatprep.subr.mxu0 0.0
        %1229 = vmatpush1.msra.mxu0 %v1175
        %1230 = vmatprep.subr.mxu0 0.0
        %1231 = vmatpush1.msra.mxu0 %v1176
        %1232 = vmatprep.subr.mxu0 0.0
        %1233 = vmatpush1.msra.mxu0 %v1177
        %1234 = vmatprep.subr.mxu0 0.0
        %1235 = vmatpush1.msra.mxu0 %v1178
        %1236 = vmatprep.subr.mxu0 0.0
        %1237 = vmatpush1.msra.mxu0 %v1179
        %1238 = vmatprep.subr.mxu0 0.0
        %1239 = vmatpush1.msra.mxu0 %v1180
        %1240 = vmatprep.subr.mxu0 0.0
        %1241 = vmatpush1.msra.mxu0 %v1181
        %1242 = vmatprep.subr.mxu0 0.0
        %1243 = vmatpush1.msra.mxu0 %v1182
        %1244 = vmatprep.subr.mxu0 0.0
        %1245 = vmatpush1.msra.mxu0 %v1183
        %1246 = vmatprep.subr.mxu0 0.0
        %1247 = vmatpush1.msra.mxu0 %v1184
        %1248 = vmatprep.subr.mxu0 0.0
        %1249 = vmatpush1.msra.mxu0 %v1185
        %1250 = vmatprep.subr.mxu0 0.0
        %1251 = vmatpush1.msra.mxu0 %v1186
        %1252 = vmatprep.subr.mxu0 0.0
        %1253 = vmatpush1.msra.mxu0 %v1187
        %1254 = vmatprep.subr.mxu0 0.0
        %1255 = vmatpush1.msra.mxu0 %v1188
        %1256 = vmatprep.subr.mxu0 0.0
        %1257 = vmatpush1.msra.mxu0 %v1189
        %1258 = vmatprep.subr.mxu0 0.0
        %1259 = vmatpush1.msra.mxu0 %v1190
        %1260 = vmatprep.subr.mxu0 0.0
        %1261 = vmatpush1.msra.mxu0 %v1191
        %1262 = vmatprep.subr.mxu0 0.0
        %1263 = vmatpush1.msra.mxu0 %v1192
        %1264 = vmatprep.mubr.f32.mxu0 %v1158
        %1265 = vmatmul.mubr.f32.gmra.mrb[0].mxu0 %v1157
        %v1266 = vpop.f32.mrb[0].mxu0
        %v1267 = vadd.f32 %v1198, %v1266
        %v1268 = vpop.f32.mrb[0].mxu0
        %1269 = vmatprep.mubr.f32.mxu0 %v1160
        %1270 = vmatmul.mubr.f32.gmra.mrb[0].mxu0 %v1159
        %v1271 = vpop.f32.mrb[0].mxu0
        %v1272 = vadd.f32 %v1198, %v1271
        %v1273 = vpop.f32.mrb[0].mxu0
        %1274 = vdwg.mxu0
        %v1275 = vld [vmem:[#allocation9] sm:$0xff]
        %v1276 = vld [vmem:[#allocation9 + $0x8] sm:$0xff]
        %v1277 = vld [vmem:[#allocation9 + $0x10] sm:$0xff]
        %v1278 = vld [vmem:[#allocation9 + $0x18] sm:$0xff]
        %v1279 = vld [vmem:[%s792] sm:$0xff]
        %v1280 = vld [vmem:[%s792 + $0x8] sm:$0xff]
        %v1281 = vld [vmem:[%s792 + $0x10] sm:$0xff]
        %v1282 = vld [vmem:[%s792 + $0x18] sm:$0xff]
        %v1283 = vld [vmem:[%s792 + $0x20] sm:$0xff]
        %v1284 = vld [vmem:[%s792 + $0x28] sm:$0xff]
        %v1285 = vld [vmem:[%s792 + $0x30] sm:$0xff]
        %v1286 = vld [vmem:[%s792 + $0x38] sm:$0xff]
        %v1287 = vld [vmem:[%s792 + $0x40] sm:$0xff]
        %v1288 = vld [vmem:[%s792 + $0x48] sm:$0xff]
        %v1289 = vld [vmem:[%s792 + $0x50] sm:$0xff]
        %v1290 = vld [vmem:[%s792 + $0x58] sm:$0xff]
        %v1291 = vld [vmem:[%s792 + $0x60] sm:$0xff]
        %v1292 = vld [vmem:[%s792 + $0x68] sm:$0xff]
        %v1293 = vld [vmem:[%s792 + $0x70] sm:$0xff]
        %v1294 = vld [vmem:[%s792 + $0x78] sm:$0xff]
        %v1295 = vld [vmem:[%s792 + $0x80] sm:$0xff]
        %v1296 = vld [vmem:[%s792 + $0x88] sm:$0xff]
        %v1297 = vld [vmem:[%s792 + $0x90] sm:$0xff]
        %v1298 = vld [vmem:[%s792 + $0x98] sm:$0xff]
        %v1299 = vld [vmem:[%s792 + $0xa0] sm:$0xff]
        %v1300 = vld [vmem:[%s792 + $0xa8] sm:$0xff]
        %v1301 = vld [vmem:[%s792 + $0xb0] sm:$0xff]
        %v1302 = vld [vmem:[%s792 + $0xb8] sm:$0xff]
        %v1303 = vld [vmem:[%s792 + $0xc0] sm:$0xff]
        %v1304 = vld [vmem:[%s792 + $0xc8] sm:$0xff]
        %v1305 = vld [vmem:[%s792 + $0xd0] sm:$0xff]
        %v1306 = vld [vmem:[%s792 + $0xd8] sm:$0xff]
        %v1307 = vld [vmem:[%s792 + $0xe0] sm:$0xff]
        %v1308 = vld [vmem:[%s792 + $0xe8] sm:$0xff]
        %v1309 = vld [vmem:[%s792 + $0xf0] sm:$0xff]
        %v1310 = vld [vmem:[%s792 + $0xf8] sm:$0xff]
        %1311 = vmatprep.subr.mxu0 0.0
        %1312 = vmatpush1.msra.mxu0 %v1279
        %1313 = vmatprep.subr.mxu0 0.0
        %1314 = vmatpush1.msra.mxu0 %v1280
        %1315 = vmatprep.subr.mxu0 0.0
        %1316 = vmatpush1.msra.mxu0 %v1281
        %1317 = vmatprep.subr.mxu0 0.0
        %1318 = vmatpush1.msra.mxu0 %v1282
        %1319 = vmatprep.subr.mxu0 0.0
        %1320 = vmatpush1.msra.mxu0 %v1283
        %1321 = vmatprep.subr.mxu0 0.0
        %1322 = vmatpush1.msra.mxu0 %v1284
        %1323 = vmatprep.subr.mxu0 0.0
        %1324 = vmatpush1.msra.mxu0 %v1285
        %1325 = vmatprep.subr.mxu0 0.0
        %1326 = vmatpush1.msra.mxu0 %v1286
        %1327 = vmatprep.subr.mxu0 0.0
        %1328 = vmatpush1.msra.mxu0 %v1287
        %1329 = vmatprep.subr.mxu0 0.0
        %1330 = vmatpush1.msra.mxu0 %v1288
        %1331 = vmatprep.subr.mxu0 0.0
        %1332 = vmatpush1.msra.mxu0 %v1289
        %1333 = vmatprep.subr.mxu0 0.0
        %1334 = vmatpush1.msra.mxu0 %v1290
        %1335 = vmatprep.subr.mxu0 0.0
        %1336 = vmatpush1.msra.mxu0 %v1291
        %1337 = vmatprep.subr.mxu0 0.0
        %1338 = vmatpush1.msra.mxu0 %v1292
        %1339 = vmatprep.subr.mxu0 0.0
        %1340 = vmatpush1.msra.mxu0 %v1293
        %1341 = vmatprep.subr.mxu0 0.0
        %1342 = vmatpush1.msra.mxu0 %v1294
        %1343 = vmatprep.subr.mxu0 0.0
        %1344 = vmatpush1.msra.mxu0 %v1295
        %1345 = vmatprep.subr.mxu0 0.0
        %1346 = vmatpush1.msra.mxu0 %v1296
        %1347 = vmatprep.subr.mxu0 0.0
        %1348 = vmatpush1.msra.mxu0 %v1297
        %1349 = vmatprep.subr.mxu0 0.0
        %1350 = vmatpush1.msra.mxu0 %v1298
        %1351 = vmatprep.subr.mxu0 0.0
        %1352 = vmatpush1.msra.mxu0 %v1299
        %1353 = vmatprep.subr.mxu0 0.0
        %1354 = vmatpush1.msra.mxu0 %v1300
        %1355 = vmatprep.subr.mxu0 0.0
        %1356 = vmatpush1.msra.mxu0 %v1301
        %1357 = vmatprep.subr.mxu0 0.0
        %1358 = vmatpush1.msra.mxu0 %v1302
        %1359 = vmatprep.subr.mxu0 0.0
        %1360 = vmatpush1.msra.mxu0 %v1303
        %1361 = vmatprep.subr.mxu0 0.0
        %1362 = vmatpush1.msra.mxu0 %v1304
        %1363 = vmatprep.subr.mxu0 0.0
        %1364 = vmatpush1.msra.mxu0 %v1305
        %1365 = vmatprep.subr.mxu0 0.0
        %1366 = vmatpush1.msra.mxu0 %v1306
        %1367 = vmatprep.subr.mxu0 0.0
        %1368 = vmatpush1.msra.mxu0 %v1307
        %1369 = vmatprep.subr.mxu0 0.0
        %1370 = vmatpush1.msra.mxu0 %v1308
        %1371 = vmatprep.subr.mxu0 0.0
        %1372 = vmatpush1.msra.mxu0 %v1309
        %1373 = vmatprep.subr.mxu0 0.0
        %1374 = vmatpush1.msra.mxu0 %v1310
        %1375 = vmatprep.mubr.f32.mxu0 %v1276
        %1376 = vmatmul.mubr.f32.gmra.mrb[0].mxu0 %v1275
        %v1377 = vpop.f32.mrb[0].mxu0
        %v1378 = vadd.f32 0.0, %v1377
        %v1379 = vpop.f32.mrb[0].mxu0
        %1380 = vmatprep.mubr.f32.mxu0 %v1278
        %1381 = vmatmul.mubr.f32.gmra.mrb[0].mxu0 %v1277
        %v1382 = vpop.f32.mrb[0].mxu0
        %v1383 = vadd.f32 0.0, %v1382
        %v1384 = vpop.f32.mrb[0].mxu0
        %1385 = vdwg.mxu0
        %v1386 = vld [vmem:[%s917] sm:$0x1]
        %v1388 = vlaneseq
        %v1389 = vshrl.u32 %v1388, 7
        %v1390 = vsub.s32 0, %v1389
        %v1391 = vrot.slane %v1386, %v1390
        %v1393 = vadd.f32 %v1036, %v1391
        %v1394 = vmul.f32 %v1393, 0.088388346
        %v1395 = vld [vmem:[%s920] sm:$0x1]
        %v1397 = vlaneseq
        %v1398 = vshrl.u32 %v1397, 7
        %v1399 = vsub.s32 0, %v1398
        %v1400 = vrot.slane %v1395, %v1399
        %v1402 = vadd.f32 %v1036, %v1400
        %v1403 = vmul.f32 %v1402, 0.088388346
        %1404 = vmatprep.subr.mxu0 0.0
        %1405 = vmatpush1.xpose.msra.mxu0 %v1378
        %1406 = vmatprep.subr.mxu0 0.0
        %1407 = vmatpush1.xpose.msra.mxu0 %v1383
        %1408 = vmatprep.subr.mxu0 0.0
        %1409 = vmatpush1.xpose.msra.mxu0 0.0
        %1410 = vmatprep.subr.mxu0 0.0
        %1411 = vmatpush1.xpose.msra.mxu0 0.0
        %1412 = vmatprep.subr.mxu0 0.0
        %1413 = vmatpush1.xpose.msra.mxu0 0.0
        %1414 = vmatprep.subr.mxu0 0.0
        %1415 = vmatpush1.xpose.msra.mxu0 0.0
        %1416 = vmatprep.subr.mxu0 0.0
        %1417 = vmatpush1.xpose.msra.mxu0 0.0
        %1418 = vmatprep.subr.mxu0 0.0
        %1419 = vmatpush1.xpose.msra.mxu0 0.0
        %1420 = vmatprep.subr.mxu0 0.0
        %1421 = vmatpush1.xpose.msra.mxu0 0.0
        %1422 = vmatprep.subr.mxu0 0.0
        %1423 = vmatpush1.xpose.msra.mxu0 0.0
        %1424 = vmatprep.subr.mxu0 0.0
        %1425 = vmatpush1.xpose.msra.mxu0 0.0
        %1426 = vmatprep.subr.mxu0 0.0
        %1427 = vmatpush1.xpose.msra.mxu0 0.0
        %1428 = vmatprep.subr.mxu0 0.0
        %1429 = vmatpush1.xpose.msra.mxu0 0.0
        %1430 = vmatprep.subr.mxu0 0.0
        %1431 = vmatpush1.xpose.msra.mxu0 0.0
        %1432 = vmatprep.subr.mxu0 0.0
        %1433 = vmatpush1.xpose.msra.mxu0 0.0
        %1434 = vmatprep.subr.mxu0 0.0
        %1435 = vmatpush1.xpose.msra.mxu0 0.0
        %1436 = vmatprep.subr.mxu0 0.0
        %1437 = vmatpush1.xpose.msra.mxu0 0.0
        %1438 = vmatprep.subr.mxu0 0.0
        %1439 = vmatpush1.xpose.msra.mxu0 0.0
        %1440 = vmatprep.subr.mxu0 0.0
        %1441 = vmatpush1.xpose.msra.mxu0 0.0
        %1442 = vmatprep.subr.mxu0 0.0
        %1443 = vmatpush1.xpose.msra.mxu0 0.0
        %1444 = vmatprep.subr.mxu0 0.0
        %1445 = vmatpush1.xpose.msra.mxu0 0.0
        %1446 = vmatprep.subr.mxu0 0.0
        %1447 = vmatpush1.xpose.msra.mxu0 0.0
        %1448 = vmatprep.subr.mxu0 0.0
        %1449 = vmatpush1.xpose.msra.mxu0 0.0
        %1450 = vmatprep.subr.mxu0 0.0
        %1451 = vmatpush1.xpose.msra.mxu0 0.0
        %1452 = vmatprep.subr.mxu0 0.0
        %1453 = vmatpush1.xpose.msra.mxu0 0.0
        %1454 = vmatprep.subr.mxu0 0.0
        %1455 = vmatpush1.xpose.msra.mxu0 0.0
        %1456 = vmatprep.subr.mxu0 0.0
        %1457 = vmatpush1.xpose.msra.mxu0 0.0
        %1458 = vmatprep.subr.mxu0 0.0
        %1459 = vmatpush1.xpose.msra.mxu0 0.0
        %1460 = vmatprep.subr.mxu0 0.0
        %1461 = vmatpush1.xpose.msra.mxu0 0.0
        %1462 = vmatprep.subr.mxu0 0.0
        %1463 = vmatpush1.xpose.msra.mxu0 0.0
        %1464 = vmatprep.subr.mxu0 0.0
        %1465 = vmatpush1.xpose.msra.mxu0 0.0
        %1466 = vmatprep.subr.mxu0 0.0
        %1467 = vmatpush1.xpose.msra.mxu0 0.0
        %1468 = vmatprep.mubr.f32.mxu0 0.0
        %1469 = vmatmul.mubr.f32.gmra.mrb[0].mxu0 %v1403
        %v1470 = vpop.f32.mrb[0].mxu0
        %v1471 = vadd.f32 0.0, %v1470
        %v1472 = vpop.f32.mrb[0].mxu0
        %1473 = vdwg.mxu0
        %1474 = vmatprep.subr.mxu0 0.0
        %1475 = vmatpush1.xpose.msra.mxu0 %v1149
        %1476 = vmatprep.subr.mxu0 0.0
        %1477 = vmatpush1.xpose.msra.mxu0 %v1154
        %1478 = vmatprep.subr.mxu0 0.0
        %1479 = vmatpush1.xpose.msra.mxu0 0.0
        %1480 = vmatprep.subr.mxu0 0.0
        %1481 = vmatpush1.xpose.msra.mxu0 0.0
        %1482 = vmatprep.subr.mxu0 0.0
        %1483 = vmatpush1.xpose.msra.mxu0 0.0
        %1484 = vmatprep.subr.mxu0 0.0
        %1485 = vmatpush1.xpose.msra.mxu0 0.0
        %1486 = vmatprep.subr.mxu0 0.0
        %1487 = vmatpush1.xpose.msra.mxu0 0.0
        %1488 = vmatprep.subr.mxu0 0.0
        %1489 = vmatpush1.xpose.msra.mxu0 0.0
        %1490 = vmatprep.subr.mxu0 0.0
        %1491 = vmatpush1.xpose.msra.mxu0 0.0
        %1492 = vmatprep.subr.mxu0 0.0
        %1493 = vmatpush1.xpose.msra.mxu0 0.0
        %1494 = vmatprep.subr.mxu0 0.0
        %1495 = vmatpush1.xpose.msra.mxu0 0.0
        %1496 = vmatprep.subr.mxu0 0.0
        %1497 = vmatpush1.xpose.msra.mxu0 0.0
        %1498 = vmatprep.subr.mxu0 0.0
        %1499 = vmatpush1.xpose.msra.mxu0 0.0
        %1500 = vmatprep.subr.mxu0 0.0
        %1501 = vmatpush1.xpose.msra.mxu0 0.0
        %1502 = vmatprep.subr.mxu0 0.0
        %1503 = vmatpush1.xpose.msra.mxu0 0.0
        %1504 = vmatprep.subr.mxu0 0.0
        %1505 = vmatpush1.xpose.msra.mxu0 0.0
        %1506 = vmatprep.subr.mxu0 0.0
        %1507 = vmatpush1.xpose.msra.mxu0 0.0
        %1508 = vmatprep.subr.mxu0 0.0
        %1509 = vmatpush1.xpose.msra.mxu0 0.0
        %1510 = vmatprep.subr.mxu0 0.0
        %1511 = vmatpush1.xpose.msra.mxu0 0.0
        %1512 = vmatprep.subr.mxu0 0.0
        %1513 = vmatpush1.xpose.msra.mxu0 0.0
        %1514 = vmatprep.subr.mxu0 0.0
        %1515 = vmatpush1.xpose.msra.mxu0 0.0
        %1516 = vmatprep.subr.mxu0 0.0
        %1517 = vmatpush1.xpose.msra.mxu0 0.0
        %1518 = vmatprep.subr.mxu0 0.0
        %1519 = vmatpush1.xpose.msra.mxu0 0.0
        %1520 = vmatprep.subr.mxu0 0.0
        %1521 = vmatpush1.xpose.msra.mxu0 0.0
        %1522 = vmatprep.subr.mxu0 0.0
        %1523 = vmatpush1.xpose.msra.mxu0 0.0
        %1524 = vmatprep.subr.mxu0 0.0
        %1525 = vmatpush1.xpose.msra.mxu0 0.0
        %1526 = vmatprep.subr.mxu0 0.0
        %1527 = vmatpush1.xpose.msra.mxu0 0.0
        %1528 = vmatprep.subr.mxu0 0.0
        %1529 = vmatpush1.xpose.msra.mxu0 0.0
        %1530 = vmatprep.subr.mxu0 0.0
        %1531 = vmatpush1.xpose.msra.mxu0 0.0
        %1532 = vmatprep.subr.mxu0 0.0
        %1533 = vmatpush1.xpose.msra.mxu0 0.0
        %1534 = vmatprep.subr.mxu0 0.0
        %1535 = vmatpush1.xpose.msra.mxu0 0.0
        %1536 = vmatprep.subr.mxu0 0.0
        %1537 = vmatpush1.xpose.msra.mxu0 0.0
        %1538 = vmatprep.mubr.f32.mxu0 0.0
        %1539 = vmatmul.mubr.f32.gmra.mrb[0].mxu0 %v1394
        %v1540 = vpop.f32.mrb[0].mxu0
        %v1541 = vadd.f32 %v1471, %v1540
        %v1542 = vpop.f32.mrb[0].mxu0
        %1543 = vdwg.mxu0
        %v1544 = vld [vmem:[%s905] sm:$0x1]
        %vm1545 = vcmp.eq.s32.totalorder %v1544, 0
        %v1546 = vsel %vm1545, -1e+30, 0.0
        %v1548 = vlaneseq
        %v1549 = vshrl.u32 %v1548, 7
        %v1550 = vsub.s32 0, %v1549
        %v1551 = vrot.slane %v1546, %v1550
        %v1553 = vadd.f32 %v1541, %v1551
        %vm1554 = vcmask 130048
        %v1555 = vsel %vm1554, %v1553, -inf
        %1556 = vmax.xlane.f32.xlu0 %v1555
        %v1557 = vpop.xlane.xlu0 %1556
        %v1558 = vsub.f32 %v1553, %v1557
        %v1559 = vmul.f32 %v1558, 1.442695
        %v1560 = vpow.pop %v1559
        %v1561 = vsel %vm1554, %v1560, 0.0
        %1562 = vadd.xlane.f32.xlu0 %v1561
        %v1563 = vpop.xlane.xlu0 %1562
        %v1564 = vrcp.pop %v1563
        %v1565 = vmul.f32 %v1560, %v1564
        %v1566 = vsel %vm1545, 1, 0
        %v1567 = vcvt.s32.f32 %v1566
        %v1568 = vsub.f32 1.0, %v1567
        %v1570 = vlaneseq
        %v1571 = vshrl.u32 %v1570, 7
        %v1572 = vsub.s32 0, %v1571
        %v1573 = vrot.slane %v1568, %v1572
        %v1575 = vmul.f32 %v1565, %v1573
        %v1577 = vsel %vm1554, %v1575, 0
        %1579 = vmatprep.subr.mxu0 0.0
        %1580 = vmatpush1.msra.mxu0 %v1267
        %1581 = vmatprep.subr.mxu0 0.0
        %1582 = vmatpush1.msra.mxu0 %v1272
        %1583 = vmatprep.subr.mxu0 0.0
        %1584 = vmatpush1.msra.mxu0 0.0
        %1585 = vmatprep.subr.mxu0 0.0
        %1586 = vmatpush1.msra.mxu0 0.0
        %1587 = vmatprep.subr.mxu0 0.0
        %1588 = vmatpush1.msra.mxu0 0.0
        %1589 = vmatprep.subr.mxu0 0.0
        %1590 = vmatpush1.msra.mxu0 0.0
        %1591 = vmatprep.subr.mxu0 0.0
        %1592 = vmatpush1.msra.mxu0 0.0
        %1593 = vmatprep.subr.mxu0 0.0
        %1594 = vmatpush1.msra.mxu0 0.0
        %1595 = vmatprep.subr.mxu0 0.0
        %1596 = vmatpush1.msra.mxu0 0.0
        %1597 = vmatprep.subr.mxu0 0.0
        %1598 = vmatpush1.msra.mxu0 0.0
        %1599 = vmatprep.subr.mxu0 0.0
        %1600 = vmatpush1.msra.mxu0 0.0
        %1601 = vmatprep.subr.mxu0 0.0
        %1602 = vmatpush1.msra.mxu0 0.0
        %1603 = vmatprep.subr.mxu0 0.0
        %1604 = vmatpush1.msra.mxu0 0.0
        %1605 = vmatprep.subr.mxu0 0.0
        %1606 = vmatpush1.msra.mxu0 0.0
        %1607 = vmatprep.subr.mxu0 0.0
        %1608 = vmatpush1.msra.mxu0 0.0
        %1609 = vmatprep.subr.mxu0 0.0
        %1610 = vmatpush1.msra.mxu0 0.0
        %1611 = vmatprep.subr.mxu0 0.0
        %1612 = vmatpush1.msra.mxu0 0.0
        %1613 = vmatprep.subr.mxu0 0.0
        %1614 = vmatpush1.msra.mxu0 0.0
        %1615 = vmatprep.subr.mxu0 0.0
        %1616 = vmatpush1.msra.mxu0 0.0
        %1617 = vmatprep.subr.mxu0 0.0
        %1618 = vmatpush1.msra.mxu0 0.0
        %1619 = vmatprep.subr.mxu0 0.0
        %1620 = vmatpush1.msra.mxu0 0.0
        %1621 = vmatprep.subr.mxu0 0.0
        %1622 = vmatpush1.msra.mxu0 0.0
        %1623 = vmatprep.subr.mxu0 0.0
        %1624 = vmatpush1.msra.mxu0 0.0
        %1625 = vmatprep.subr.mxu0 0.0
        %1626 = vmatpush1.msra.mxu0 0.0
        %1627 = vmatprep.subr.mxu0 0.0
        %1628 = vmatpush1.msra.mxu0 0.0
        %1629 = vmatprep.subr.mxu0 0.0
        %1630 = vmatpush1.msra.mxu0 0.0
        %1631 = vmatprep.subr.mxu0 0.0
        %1632 = vmatpush1.msra.mxu0 0.0
        %1633 = vmatprep.subr.mxu0 0.0
        %1634 = vmatpush1.msra.mxu0 0.0
        %1635 = vmatprep.subr.mxu0 0.0
        %1636 = vmatpush1.msra.mxu0 0.0
        %1637 = vmatprep.subr.mxu0 0.0
        %1638 = vmatpush1.msra.mxu0 0.0
        %1639 = vmatprep.subr.mxu0 0.0
        %1640 = vmatpush1.msra.mxu0 0.0
        %1641 = vmatprep.subr.mxu0 0.0
        %1642 = vmatpush1.msra.mxu0 0.0
        %1643 = vmatprep.mubr.f32.mxu0 0.0
        %1644 = vmatmul.mubr.f32.gmra.mrb[0].mxu0 %v1577
        %v1645 = vpop.f32.mrb[0].mxu0
        %v1646 = vadd.f32 0.0, %v1645
        %v1647 = vpop.f32.mrb[0].mxu0
        %1648 = vdwg.mxu0
        %v1649 = vld [vmem:[#allocation2] sm:$0xff]
        %v1650 = vld [vmem:[#allocation2 + $0x8] sm:$0xff]
        %v1651 = vld [vmem:[%s801] sm:$0xff]
        %v1652 = vld [vmem:[%s801 + $0x8] sm:$0xff]
        %v1653 = vld [vmem:[%s801 + $0x10] sm:$0xff]
        %v1654 = vld [vmem:[%s801 + $0x18] sm:$0xff]
        %v1655 = vld [vmem:[%s801 + $0x20] sm:$0xff]
        %v1656 = vld [vmem:[%s801 + $0x28] sm:$0xff]
        %v1657 = vld [vmem:[%s801 + $0x30] sm:$0xff]
        %v1658 = vld [vmem:[%s801 + $0x38] sm:$0xff]
        %v1659 = vld [vmem:[%s801 + $0x40] sm:$0xff]
        %v1660 = vld [vmem:[%s801 + $0x48] sm:$0xff]
        %v1661 = vld [vmem:[%s801 + $0x50] sm:$0xff]
        %v1662 = vld [vmem:[%s801 + $0x58] sm:$0xff]
        %v1663 = vld [vmem:[%s801 + $0x60] sm:$0xff]
        %v1664 = vld [vmem:[%s801 + $0x68] sm:$0xff]
        %v1665 = vld [vmem:[%s801 + $0x70] sm:$0xff]
        %v1666 = vld [vmem:[%s801 + $0x78] sm:$0xff]
        %v1667 = vld [vmem:[%s801 + $0x80] sm:$0xff]
        %v1668 = vld [vmem:[%s801 + $0x88] sm:$0xff]
        %v1669 = vld [vmem:[%s801 + $0x90] sm:$0xff]
        %v1670 = vld [vmem:[%s801 + $0x98] sm:$0xff]
        %v1671 = vld [vmem:[%s801 + $0xa0] sm:$0xff]
        %v1672 = vld [vmem:[%s801 + $0xa8] sm:$0xff]
        %v1673 = vld [vmem:[%s801 + $0xb0] sm:$0xff]
        %v1674 = vld [vmem:[%s801 + $0xb8] sm:$0xff]
        %v1675 = vld [vmem:[%s801 + $0xc0] sm:$0xff]
        %v1676 = vld [vmem:[%s801 + $0xc8] sm:$0xff]
        %v1677 = vld [vmem:[%s801 + $0xd0] sm:$0xff]
        %v1678 = vld [vmem:[%s801 + $0xd8] sm:$0xff]
        %v1679 = vld [vmem:[%s801 + $0xe0] sm:$0xff]
        %v1680 = vld [vmem:[%s801 + $0xe8] sm:$0xff]
        %v1681 = vld [vmem:[%s801 + $0xf0] sm:$0xff]
        %v1682 = vld [vmem:[%s801 + $0xf8] sm:$0xff]
        %1683 = vmatprep.subr.mxu0 %v1652
        %1684 = vmatpush1.msra.mxu0 %v1651
        %1685 = vmatprep.subr.mxu0 %v1654
        %1686 = vmatpush1.msra.mxu0 %v1653
        %1687 = vmatprep.subr.mxu0 %v1656
        %1688 = vmatpush1.msra.mxu0 %v1655
        %1689 = vmatprep.subr.mxu0 %v1658
        %1690 = vmatpush1.msra.mxu0 %v1657
        %1691 = vmatprep.subr.mxu0 %v1660
        %1692 = vmatpush1.msra.mxu0 %v1659
        %1693 = vmatprep.subr.mxu0 %v1662
        %1694 = vmatpush1.msra.mxu0 %v1661
        %1695 = vmatprep.subr.mxu0 %v1664
        %1696 = vmatpush1.msra.mxu0 %v1663
        %1697 = vmatprep.subr.mxu0 %v1666
        %1698 = vmatpush1.msra.mxu0 %v1665
        %1699 = vmatprep.subr.mxu0 %v1668
        %1700 = vmatpush1.msra.mxu0 %v1667
        %1701 = vmatprep.subr.mxu0 %v1670
        %1702 = vmatpush1.msra.mxu0 %v1669
        %1703 = vmatprep.subr.mxu0 %v1672
        %1704 = vmatpush1.msra.mxu0 %v1671
        %1705 = vmatprep.subr.mxu0 %v1674
        %1706 = vmatpush1.msra.mxu0 %v1673
        %1707 = vmatprep.subr.mxu0 %v1676
        %1708 = vmatpush1.msra.mxu0 %v1675
        %1709 = vmatprep.subr.mxu0 %v1678
        %1710 = vmatpush1.msra.mxu0 %v1677
        %1711 = vmatprep.subr.mxu0 %v1680
        %1712 = vmatpush1.msra.mxu0 %v1679
        %1713 = vmatprep.subr.mxu0 %v1682
        %1714 = vmatpush1.msra.mxu0 %v1681
        %1715 = vmatprep.subr.mxu0 0.0
        %1716 = vmatpush1.msra.mxu0 0.0
        %1717 = vmatprep.subr.mxu0 0.0
        %1718 = vmatpush1.msra.mxu0 0.0
        %1719 = vmatprep.subr.mxu0 0.0
        %1720 = vmatpush1.msra.mxu0 0.0
        %1721 = vmatprep.subr.mxu0 0.0
        %1722 = vmatpush1.msra.mxu0 0.0
        %1723 = vmatprep.subr.mxu0 0.0
        %1724 = vmatpush1.msra.mxu0 0.0
        %1725 = vmatprep.subr.mxu0 0.0
        %1726 = vmatpush1.msra.mxu0 0.0
        %1727 = vmatprep.subr.mxu0 0.0
        %1728 = vmatpush1.msra.mxu0 0.0
        %1729 = vmatprep.subr.mxu0 0.0
        %1730 = vmatpush1.msra.mxu0 0.0
        %1731 = vmatprep.subr.mxu0 0.0
        %1732 = vmatpush1.msra.mxu0 0.0
        %1733 = vmatprep.subr.mxu0 0.0
        %1734 = vmatpush1.msra.mxu0 0.0
        %1735 = vmatprep.subr.mxu0 0.0
        %1736 = vmatpush1.msra.mxu0 0.0
        %1737 = vmatprep.subr.mxu0 0.0
        %1738 = vmatpush1.msra.mxu0 0.0
        %1739 = vmatprep.subr.mxu0 0.0
        %1740 = vmatpush1.msra.mxu0 0.0
        %1741 = vmatprep.subr.mxu0 0.0
        %1742 = vmatpush1.msra.mxu0 0.0
        %1743 = vmatprep.subr.mxu0 0.0
        %1744 = vmatpush1.msra.mxu0 0.0
        %1745 = vmatprep.subr.mxu0 0.0
        %1746 = vmatpush1.msra.mxu0 0.0
        %1747 = vmatprep.mubr.f32.mxu0 0.0
        %1748 = vmatmul.mubr.f32.gmra.mrb[0].mxu0 %v1646
        %v1749 = vpop.f32.mrb[0].mxu0
        %v1750 = vadd.f32 0.0, %v1749
        %v1751 = vpop.f32.mrb[0].mxu0
        %v1752 = vadd.f32 0.0, %v1751
        %1753 = vdwg.mxu0
        %v1754 = vadd.f32 %v1649, %v1750
        %v1755 = vadd.f32 %v1650, %v1752
        %1756 = vst [vmem:[#allocation2] sm:$0xff] %v1754
        %1757 = vst [vmem:[#allocation2 + $0x8] sm:$0xff] %v1755
        %p1758 = scmp.eq.s32.totalorder %s44, 1
        // Predicated region
        $region125: #{tpu_custom_call.1} parent=83 // pred_check
          %p1759 = pneg %p1758
        $region126: #{tpu_custom_call.1} parent=83 // pred_check_branch
          %1761 = sbr.rel (%p1759) target = $region128
        $region127: #{tpu_custom_call.1} parent=83 // pred_region
          %v1762 = vld [vmem:[#allocation2] sm:$0xff]
          %v1763 = vld [vmem:[#allocation2 + $0x8] sm:$0xff]
          %v1764 = vld [vmem:[%s15] sm:$0x3]
          %v1766 = vlaneseq
          %v1767 = vshrl.u32 %v1766, 7
          %v1768 = vsub.s32 0, %v1767
          %v1769 = vrot.slane %v1764, %v1768
          %v1770 = vlaneseq
          %v1771 = vshrl.u32 %v1770, 7
          %v1772 = vsub.s32 1, %v1771
          %v1773 = vrot.slane %v1764, %v1772
          %v1776 = vadd.f32 %v1762, %v1769
          %v1777 = vadd.f32 %v1763, %v1773
          %1778 = vst [vmem:[%s902] sm:$0xff] %v1776
          %1779 = vst [vmem:[%s902 + $0x8] sm:$0xff] %v1777
        $region128: #{tpu_custom_call.1} parent=83 // pred_fallthru
          _
        %s1780 = sand.u32 %s474, 1
        %s1781 = scalar_lea.sflag [#allocation5], %s1780
        %s1782 = sand.u32 %s474, 1
        %s1783 = smul.addr %s1782, 16
        %s1784 = scalar_lea.vmem [#allocation16], %s1783
        // Predicated region
        $region129: #{tpu_custom_call.1} parent=83 // pred_check
          %p1785 = pneg %p484
        $region130: #{tpu_custom_call.1} parent=83 // pred_check_branch
          %1787 = sbr.rel (%p1785) target = $region132
        $region131: #{tpu_custom_call.1} parent=83 // pred_region
          %s1789 = ssub.s32 256, 256
          %1790 = vsyncadd %s1781, %s1789
          %s1791 = smul.addr %s43, 2
          %s1792 = smul.addr %s42, 4
          %s1793 = sadd.s32 %s1791, %s1792
          %s1794 = smul.addr %s1793, 128
          %s1795 = scalar_lea.hbm %s16, %s1794
          %s1797 = sshll.u32 %s1784, 4
          %s1798 = int_to_ptr.vmem [resolvable:$true] %s1797
          %1800 = dma.vmem_to_hbm [thread:$0]  %s1798, 256, %s1795, %s1781
        $region132: #{tpu_custom_call.1} parent=83 // pred_fallthru
          _
      $region84: #{tpu_custom_call.1} parent=5 // pred_fallthru
        _
      %p1801 = scmp.le.s32.totalorder 2, %s32
      // Predicated region
      $region133: #{tpu_custom_call.1} parent=5 // pred_check
        %p1802 = pneg %p1801
      $region134: #{tpu_custom_call.1} parent=5 // pred_check_branch
        %1804 = sbr.rel (%p1802) target = $region136
      $region135: #{tpu_custom_call.1} parent=5 // pred_region
        %s1805 = ssub.s32 %s32, 2
        // Predicated region
        $region137: #{tpu_custom_call.1} parent=135 // pred_check
          %p1806 = pneg %p490
        $region138: #{tpu_custom_call.1} parent=135 // pred_check_branch
          %1808 = sbr.rel (%p1806) target = $region140
        $region139: #{tpu_custom_call.1} parent=135 // pred_region
          %s1809 = sand.u32 %s475, 1
          %s1810 = scalar_lea.sflag [#allocation5], %s1809
          %s1811 = sand.u32 %s475, 1
          %s1812 = smul.addr %s1811, 16
          %s1813 = scalar_lea.vmem [#allocation16], %s1812
          %1814 = dma.done %s1810, 256
        $region140: #{tpu_custom_call.1} parent=135 // pred_fallthru
          _
      $region136: #{tpu_custom_call.1} parent=5 // pred_fallthru
        _
    $region6: #{tpu_custom_call.1} parent=1 // loop_footer
      %s36 = sadd.s32 1, %s32
    $region7: #{tpu_custom_call.1} parent=1 // loop_footer_branch
      %31 = sbr.rel target = $region3
    $region8: #{tpu_custom_call.1} parent=1 // loop_exit
      _
    %1815 = vsyncpa [#allocation4], 1
    %s1816 = scalar_lea.sflag [#allocation4], 1
    %1817 = vsyncpa %s1816, 1
    %1818 = vsyncpa [#allocation7], 1
    %s1819 = scalar_lea.sflag [#allocation7], 1
    %1820 = vsyncpa %s1819, 1
    %1821 = vsyncpa [#allocation10], 1
    %1822 = vsyncpa [#allocation5], 1
    %s1823 = scalar_lea.sflag [#allocation5], 1
    %1824 = vsyncpa %s1823, 1

</llo_original>
